<compile_context>
chip_gen: v6e
topology: v6e:2x2x1
jax: 0.10.0
libtpu: 0.0.40
codegen_flags: <defaults>
</compile_context>

<pallas_src>
import numpy as np
import jax
import jax.numpy as jnp
from jax.experimental import pallas as pl
from jax.experimental.pallas import tpu as pltpu


# ----------------------------- Pallas kernel -----------------------------
def rgcn_fused_kernel(feat_ref, w_cat_ref, adj_ref, loop_w_ref, bias_ref, out_ref, h_ref):
    """Fully fused RelGraphConv('bdd') layer: one grid step, two big MXU calls."""
    N, D = feat_ref.shape
    R = h_ref.shape[0] // N

    feat = feat_ref[...]  # (N, D) f32

    # Stage 1: all R relation transforms in ONE lane-dense MXU call: (N, D) @ (D, R*D)
    h_all = jnp.dot(feat, w_cat_ref[...], preferred_element_type=jnp.float32)  # (N, R*D)

    # Relayout (N, R*D) -> (R*N, D) via static, 128-aligned lane slices into a VMEM staging
    # buffer (avoids any in-kernel reshape/transpose).
    for r in range(R):  # static unroll, R is small
        h_ref[r * N:(r + 1) * N, :] = h_all[:, r * D:(r + 1) * D]

    # Stage 2: aggregation over all (relation, source-node) pairs in ONE big-K MXU call:
    #   (N, R*N) @ (R*N, D).  adj arrives as bf16 (DMA savings); accumulate in f32.
    agg = jnp.dot(adj_ref[...].astype(jnp.float32), h_ref[...],
                  preferred_element_type=jnp.float32)  # (N, D)

    # Self-loop + bias, written straight to the output (no accumulator scratch).
    out_ref[...] = (agg
                    + jnp.dot(feat, loop_w_ref[...], preferred_element_type=jnp.float32)
                    + bias_ref[...])


def rgcn_layer_fused(feat, w_cat, adj_hcat, loop_w, bias):
    """feat: (N, D) f32; w_cat: (D, R*D) f32; adj_hcat: (N, R*N) bf16; loop_w: (D, D); bias: (1, D)."""
    N, D = feat.shape
    RD = w_cat.shape[1]
    R = RD // D

    # TODO(synk): for production graph sizes, add a "parallel" dst-row tiling axis (per-generation
    # tile sizes; ~half the adj tile on v7x's 64 MiB VMEM) and raise vmem_limit_bytes as needed.
    return pl.pallas_call(
        rgcn_fused_kernel,
        out_shape=jax.ShapeDtypeStruct((N, D), jnp.float32),
        grid_spec=pltpu.PrefetchScalarGridSpec(
            num_scalar_prefetch=0,
            grid=(1,),
            in_specs=[
                pl.BlockSpec((N, D), lambda i: (0, 0)),        # feat
                pl.BlockSpec((D, RD), lambda i: (0, 0)),       # relation-concatenated weights
                pl.BlockSpec((N, R * N), lambda i: (0, 0)),    # relation-major adjacency (bf16)
                pl.BlockSpec((D, D), lambda i: (0, 0)),        # self-loop weight
                pl.BlockSpec((1, D), lambda i: (0, 0)),        # bias
            ],
            out_specs=pl.BlockSpec((N, D), lambda i: (0, 0)),
            scratch_shapes=[pltpu.VMEM((R * N, D), jnp.float32)],  # staging buffer for fused K
        ),
        compiler_params=pltpu.CompilerParams(
            dimension_semantics=("arbitrary",),
        ),
    )(feat, w_cat, adj_hcat, loop_w, bias)


# ----------------------------- model wrapper -----------------------------
def link_predict_forward(params, node_ids, src, dst, etypes, norm):
    """LinkPredict.forward(g, h, r, norm): embedding lookup + one RelGraphConv('bdd')."""
    # Layer 1: EmbeddingLayer (gather is glue, kept in plain JAX)
    feat = jnp.take(params["emb"], node_ids, axis=0)  # (N, h_dim)
    N, D = feat.shape
    R = params["w_full"].shape[0]

    # Dense per-relation, norm-weighted adjacency, relation-major on the lane axis:
    #   adj_hcat[v, r*N + u] = sum of norm over edges (u -> v) with relation r
    # TODO(synk): at real graph scale replace this dense O(R*N^2) build with a scalar-prefetch
    # CSR/edge-block gather instead of materializing it in HBM.
    adj = jnp.zeros((N, R, N), jnp.float32)
    adj = adj.at[dst, etypes, src].add(norm)
    adj_hcat = adj.reshape(N, R * N).astype(jnp.bfloat16)  # bf16 halves DMA bytes for the largest operand

    # Layer 2: RelGraphConv ('bdd', self_loop, bias, activation=None, dropout=0) in Pallas
    return rgcn_layer_fused(feat, params["w_cat"], adj_hcat, params["loop_w"], params["bias"])


def init_params(key, num_nodes, h_dim, num_rels, num_bases):
    num_rels2 = num_rels * 2
    submat = h_dim // num_bases
    k = jax.random.split(key, 5)

    emb = jax.random.normal(k[0], (num_nodes, h_dim), jnp.float32)

    # BDD bases: (num_rels2, num_bases, submat, submat), xavier-ish scale
    scale = float(np.sqrt(2.0 / (submat + submat)))
    w_bdd = jax.random.normal(k[1], (num_rels2, num_bases, submat, submat), jnp.float32) * scale
    # expand to dense block-diagonal (num_rels2, h_dim, h_dim)
    w_full = jnp.zeros((num_rels2, h_dim, h_dim), jnp.float32)
    for b in range(num_bases):
        sl = slice(b * submat, (b + 1) * submat)
        w_full = w_full.at[:, sl, sl].set(w_bdd[:, b])
    # relation-concatenated layout (D, R*D): w_cat[:, r*D:(r+1)*D] = w_full[r]  (one-time transform)
    w_cat = jnp.transpose(w_full, (1, 0, 2)).reshape(h_dim, num_rels2 * h_dim)

    loop_scale = float(np.sqrt(2.0 / (h_dim + h_dim)))
    loop_w = jax.random.normal(k[2], (h_dim, h_dim), jnp.float32) * loop_scale
    bias = jnp.zeros((1, h_dim), jnp.float32)

    # w_relation: used only in calc_score/get_loss, not in forward (kept for parity)
    w_relation = jax.random.normal(k[3], (num_rels, h_dim), jnp.float32) * loop_scale

    return {
        "emb": emb,
        "w_full": w_full,      # reference path
        "w_cat": w_cat,        # kernel path (same parameters, fused layout)
        "loop_w": loop_w,
        "bias": bias,
        "w_relation": w_relation,
    }


def reference_forward(params, node_ids, src, dst, etypes, norm):
    """Pure-jnp reference of the same math (same bf16-quantized adjacency), for correctness."""
    feat = jnp.take(params["emb"], node_ids, axis=0)
    N, D = feat.shape
    R = params["w_full"].shape[0]
    adj = jnp.zeros((N, R, N), jnp.float32)
    adj = adj.at[dst, etypes, src].add(norm)
    adj = adj.astype(jnp.bfloat16).astype(jnp.float32)  # same quantization as the kernel path
    h_rel = jnp.einsum("nd,rde->rne", feat, params["w_full"])
    agg = jnp.einsum("vru,rue->ve", adj, h_rel)
    return agg + feat @ params["loop_w"] + params["bias"]


if __name__ == "__main__":
    # small shapes: num_nodes(in_dim)=64, h_dim=128 (lane-dense), num_rels=4 (-> 8 relation
    # types), num_bases=4 (submat=32)
    num_nodes, h_dim, num_rels, num_bases = 64, 128, 4, 4
    num_edges = 256

    key = jax.random.PRNGKey(0)
    pkey, ekey = jax.random.split(key)
    params = init_params(pkey, num_nodes, h_dim, num_rels, num_bases)

    ks, kd, kt, kn = jax.random.split(ekey, 4)
    node_ids = jnp.arange(num_nodes, dtype=jnp.int32)                          # h in forward(g, h, r, norm)
    src = jax.random.randint(ks, (num_edges,), 0, num_nodes, jnp.int32)        # graph g edges
    dst = jax.random.randint(kd, (num_edges,), 0, num_nodes, jnp.int32)
    etypes = jax.random.randint(kt, (num_edges,), 0, num_rels * 2, jnp.int32)  # r
    norm = jax.random.uniform(kn, (num_edges,), jnp.float32, 0.1, 1.0)         # norm

    out = link_predict_forward(params, node_ids, src, dst, etypes, norm)
    out = jax.block_until_ready(out)

    ref = reference_forward(params, node_ids, src, dst, etypes, norm)
    np.testing.assert_allclose(np.asarray(out), np.asarray(ref), rtol=1e-4, atol=1e-4)

    print("KERNEL_OK")
</pallas_src>

<mosaic_0001>
module attributes {stable_mosaic.version = 11 : i64} {
  func.func @rgcn_fused_kernel(%arg0: i32, %arg1: memref<64x128xf32, #tpu.memory_space<vmem>>, %arg2: memref<128x1024xf32, #tpu.memory_space<vmem>>, %arg3: memref<64x512xbf16, #tpu.memory_space<vmem>>, %arg4: memref<128x128xf32, #tpu.memory_space<vmem>>, %arg5: memref<1x128xf32, #tpu.memory_space<vmem>>, %arg6: memref<64x128xf32, #tpu.memory_space<vmem>>, %arg7: memref<512x128xf32, #tpu.memory_space<vmem>>) attributes {dimension_semantics = [#tpu.dimension_semantics<arbitrary>], iteration_bounds = array<i64: 1>, scalar_prefetch = 0 : i64, scratch_operands = 1 : i64, tpu.core_type = #tpu.core_type<tc>, window_params = [{pipeline_mode = #tpu.pipeline_mode<synchronous>, transform_indices = @transform_0, window_bounds = array<i64: 64, 128>}, {pipeline_mode = #tpu.pipeline_mode<synchronous>, transform_indices = @transform_1, window_bounds = array<i64: 128, 1024>}, {pipeline_mode = #tpu.pipeline_mode<synchronous>, transform_indices = @transform_2, window_bounds = array<i64: 64, 512>}, {pipeline_mode = #tpu.pipeline_mode<synchronous>, transform_indices = @transform_3, window_bounds = array<i64: 128, 128>}, {pipeline_mode = #tpu.pipeline_mode<synchronous>, transform_indices = @transform_4, window_bounds = array<i64: 1, 128>}, {pipeline_mode = #tpu.pipeline_mode<synchronous>, transform_indices = @transform_5, window_bounds = array<i64: 64, 128>}]} {
    %c0 = arith.constant 0 : index
    %c0_0 = arith.constant 0 : index
    %0 = vector.load %arg1[%c0, %c0_0] : memref<64x128xf32, #tpu.memory_space<vmem>>, vector<64x128xf32>
    %c0_1 = arith.constant 0 : index
    %c0_2 = arith.constant 0 : index
    %1 = vector.load %arg2[%c0_1, %c0_2] : memref<128x1024xf32, #tpu.memory_space<vmem>>, vector<128x1024xf32>
    %cst = arith.constant dense<0.000000e+00> : vector<64x1024xf32>
    %2 = tpu.matmul %0, %1, %cst {dimension_numbers = #tpu.dot_dimension_numbers<[1], [0], [0], [1], [0, 0, 1, 1], [], []>} : vector<64x128xf32>, vector<128x1024xf32>, vector<64x1024xf32> -> vector<64x1024xf32>
    %3 = vector.extract_strided_slice %2 {offsets = [0, 0], sizes = [64, 128], strides = [1, 1]} : vector<64x1024xf32> to vector<64x128xf32>
    %c0_3 = arith.constant 0 : index
    %c0_4 = arith.constant 0 : index
    %4 = vector.load %arg7[%c0_3, %c0_4] : memref<512x128xf32, #tpu.memory_space<vmem>>, vector<64x128xf32>
    tpu.vector_store %arg7[%c0_3, %c0_4], %3 {strides = array<i32>} : memref<512x128xf32, #tpu.memory_space<vmem>>, vector<64x128xf32>,
    %5 = vector.extract_strided_slice %2 {offsets = [0, 128], sizes = [64, 128], strides = [1, 1]} : vector<64x1024xf32> to vector<64x128xf32>
    %c64 = arith.constant 64 : index
    %c0_5 = arith.constant 0 : index
    %6 = vector.load %arg7[%c64, %c0_5] : memref<512x128xf32, #tpu.memory_space<vmem>>, vector<64x128xf32>
    tpu.vector_store %arg7[%c64, %c0_5], %5 {strides = array<i32>} : memref<512x128xf32, #tpu.memory_space<vmem>>, vector<64x128xf32>,
    %7 = vector.extract_strided_slice %2 {offsets = [0, 256], sizes = [64, 128], strides = [1, 1]} : vector<64x1024xf32> to vector<64x128xf32>
    %c128 = arith.constant 128 : index
    %c0_6 = arith.constant 0 : index
    %8 = vector.load %arg7[%c128, %c0_6] : memref<512x128xf32, #tpu.memory_space<vmem>>, vector<64x128xf32>
    tpu.vector_store %arg7[%c128, %c0_6], %7 {strides = array<i32>} : memref<512x128xf32, #tpu.memory_space<vmem>>, vector<64x128xf32>,
    %9 = vector.extract_strided_slice %2 {offsets = [0, 384], sizes = [64, 128], strides = [1, 1]} : vector<64x1024xf32> to vector<64x128xf32>
    %c192 = arith.constant 192 : index
    %c0_7 = arith.constant 0 : index
    %10 = vector.load %arg7[%c192, %c0_7] : memref<512x128xf32, #tpu.memory_space<vmem>>, vector<64x128xf32>
    tpu.vector_store %arg7[%c192, %c0_7], %9 {strides = array<i32>} : memref<512x128xf32, #tpu.memory_space<vmem>>, vector<64x128xf32>,
    %11 = vector.extract_strided_slice %2 {offsets = [0, 512], sizes = [64, 128], strides = [1, 1]} : vector<64x1024xf32> to vector<64x128xf32>
    %c256 = arith.constant 256 : index
    %c0_8 = arith.constant 0 : index
    %12 = vector.load %arg7[%c256, %c0_8] : memref<512x128xf32, #tpu.memory_space<vmem>>, vector<64x128xf32>
    tpu.vector_store %arg7[%c256, %c0_8], %11 {strides = array<i32>} : memref<512x128xf32, #tpu.memory_space<vmem>>, vector<64x128xf32>,
    %13 = vector.extract_strided_slice %2 {offsets = [0, 640], sizes = [64, 128], strides = [1, 1]} : vector<64x1024xf32> to vector<64x128xf32>
    %c320 = arith.constant 320 : index
    %c0_9 = arith.constant 0 : index
    %14 = vector.load %arg7[%c320, %c0_9] : memref<512x128xf32, #tpu.memory_space<vmem>>, vector<64x128xf32>
    tpu.vector_store %arg7[%c320, %c0_9], %13 {strides = array<i32>} : memref<512x128xf32, #tpu.memory_space<vmem>>, vector<64x128xf32>,
    %15 = vector.extract_strided_slice %2 {offsets = [0, 768], sizes = [64, 128], strides = [1, 1]} : vector<64x1024xf32> to vector<64x128xf32>
    %c384 = arith.constant 384 : index
    %c0_10 = arith.constant 0 : index
    %16 = vector.load %arg7[%c384, %c0_10] : memref<512x128xf32, #tpu.memory_space<vmem>>, vector<64x128xf32>
    tpu.vector_store %arg7[%c384, %c0_10], %15 {strides = array<i32>} : memref<512x128xf32, #tpu.memory_space<vmem>>, vector<64x128xf32>,
    %17 = vector.extract_strided_slice %2 {offsets = [0, 896], sizes = [64, 128], strides = [1, 1]} : vector<64x1024xf32> to vector<64x128xf32>
    %c448 = arith.constant 448 : index
    %c0_11 = arith.constant 0 : index
    %18 = vector.load %arg7[%c448, %c0_11] : memref<512x128xf32, #tpu.memory_space<vmem>>, vector<64x128xf32>
    tpu.vector_store %arg7[%c448, %c0_11], %17 {strides = array<i32>} : memref<512x128xf32, #tpu.memory_space<vmem>>, vector<64x128xf32>,
    %c0_12 = arith.constant 0 : index
    %c0_13 = arith.constant 0 : index
    %19 = vector.load %arg3[%c0_12, %c0_13] : memref<64x512xbf16, #tpu.memory_space<vmem>>, vector<64x512xbf16>
    %20 = arith.extf %19 : vector<64x512xbf16> to vector<64x512xf32>
    %c0_14 = arith.constant 0 : index
    %c0_15 = arith.constant 0 : index
    %21 = vector.load %arg7[%c0_14, %c0_15] : memref<512x128xf32, #tpu.memory_space<vmem>>, vector<512x128xf32>
    %cst_16 = arith.constant dense<0.000000e+00> : vector<64x128xf32>
    %22 = tpu.matmul %20, %21, %cst_16 {dimension_numbers = #tpu.dot_dimension_numbers<[1], [0], [0], [1], [0, 0, 1, 1], [], []>} : vector<64x512xf32>, vector<512x128xf32>, vector<64x128xf32> -> vector<64x128xf32>
    %c0_17 = arith.constant 0 : index
    %c0_18 = arith.constant 0 : index
    %23 = vector.load %arg4[%c0_17, %c0_18] : memref<128x128xf32, #tpu.memory_space<vmem>>, vector<128x128xf32>
    %cst_19 = arith.constant dense<0.000000e+00> : vector<64x128xf32>
    %24 = tpu.matmul %0, %23, %cst_19 {dimension_numbers = #tpu.dot_dimension_numbers<[1], [0], [0], [1], [0, 0, 1, 1], [], []>} : vector<64x128xf32>, vector<128x128xf32>, vector<64x128xf32> -> vector<64x128xf32>
    %25 = arith.addf %22, %24 : vector<64x128xf32>
    %c0_20 = arith.constant 0 : index
    %c0_21 = arith.constant 0 : index
    %26 = vector.load %arg5[%c0_20, %c0_21] : memref<1x128xf32, #tpu.memory_space<vmem>>, vector<1x128xf32>
    %27 = vector.broadcast %26 : vector<1x128xf32> to vector<64x128xf32>
    %28 = arith.addf %25, %27 : vector<64x128xf32>
    %c0_22 = arith.constant 0 : index
    %c0_23 = arith.constant 0 : index
    %29 = vector.load %arg6[%c0_22, %c0_23] : memref<64x128xf32, #tpu.memory_space<vmem>>, vector<64x128xf32>
    tpu.vector_store %arg6[%c0_22, %c0_23], %28 {strides = array<i32>} : memref<64x128xf32, #tpu.memory_space<vmem>>, vector<64x128xf32>,
    return
  }
  func.func @transform_0(%arg0: i32) -> (i32, i32) {
    %c0_i32 = arith.constant 0 : i32
    %c0_i32_0 = arith.constant 0 : i32
    %c0_i32_1 = arith.constant 0 : i32
    return %c0_i32, %c0_i32_0 : i32, i32
  }
  func.func @transform_1(%arg0: i32) -> (i32, i32) {
    %c0_i32 = arith.constant 0 : i32
    %c0_i32_0 = arith.constant 0 : i32
    %c0_i32_1 = arith.constant 0 : i32
    return %c0_i32, %c0_i32_0 : i32, i32
  }
  func.func @transform_2(%arg0: i32) -> (i32, i32) {
    %c0_i32 = arith.constant 0 : i32
    %c0_i32_0 = arith.constant 0 : i32
    %c0_i32_1 = arith.constant 0 : i32
    return %c0_i32, %c0_i32_0 : i32, i32
  }
  func.func @transform_3(%arg0: i32) -> (i32, i32) {
    %c0_i32 = arith.constant 0 : i32
    %c0_i32_0 = arith.constant 0 : i32
    %c0_i32_1 = arith.constant 0 : i32
    return %c0_i32, %c0_i32_0 : i32, i32
  }
  func.func @transform_4(%arg0: i32) -> (i32, i32) {
    %c0_i32 = arith.constant 0 : i32
    %c0_i32_0 = arith.constant 0 : i32
    %c0_i32_1 = arith.constant 0 : i32
    return %c0_i32, %c0_i32_0 : i32, i32
  }
  func.func @transform_5(%arg0: i32) -> (i32, i32) {
    %c0_i32 = arith.constant 0 : i32
    %c0_i32_0 = arith.constant 0 : i32
    %c0_i32_1 = arith.constant 0 : i32
    return %c0_i32, %c0_i32_0 : i32, i32
  }
}

</mosaic_0001>

<llo_original>
// kernel: tpu_custom_call.1
$region0: #{tpu_custom_call.1}
  #allocation0 [shape = 'u32[]', space=smem, size = 0x4, offset = 0x4, fixed_abs, tag = 'smem constant byte address 0x4 - core index']
  #allocation1 [shape = 'u32[144,128]{1,0:T(1,128)}', space=vmem, size = 0x12000, scoped, tag = 'internal scratch']
  #allocation2 [shape = 'f32[512,128]{1,0:T(8,128)}', space=vmem, size = 0x40000, scoped, tag = 'scratch operand']
  %s0 = inlined_call_operand.hbm [shape: f32[64,128], index: 0, kind: input, shape index: {}]
  %s1 = inlined_call_operand.hbm [shape: f32[128,1024], index: 1, kind: input, shape index: {}]
  %s2 = inlined_call_operand.hbm [shape: bf16[64,512], index: 2, kind: input, shape index: {}]
  %s3 = inlined_call_operand.hbm [shape: f32[128,128], index: 3, kind: input, shape index: {}]
  %s4 = inlined_call_operand.vmem [shape: f32[1,128], index: 4, kind: input, shape index: {}]
  %s5 = inlined_call_operand.hbm [shape: f32[64,128], index: 5, kind: output, shape index: {}]
  %s6 = sld [smem:[#allocation0]]
  $region46: #{tpu_custom_call.1} parent=0
    _
  %s8 = ssub.s32 1, %s6
  %s9 = scalar_select 0, %s8, %s6
  $region1: #{tpu_custom_call.1} parent=0
    #allocation3 [shape = 'u8[32768]{0}', space=vmem, size = 0x8000, scoped, tag = 'input window, operand 0, single buffered']
    #allocation4 [shape = 's32[1]{0}', space=sflag, size = 0x4, scoped, tag = 'scoped memory for tpu_custom_call.1']
    #allocation5 [shape = 's32[1]{0}', space=sflag, size = 0x4, scoped, tag = 'scoped memory for tpu_custom_call.1']
    #allocation6 [shape = 'u8[524288]{0}', space=vmem, size = 0x80000, scoped, tag = 'input window, operand 1, single buffered']
    #allocation7 [shape = 's32[1]{0}', space=sflag, size = 0x4, scoped, tag = 'scoped memory for tpu_custom_call.1']
    #allocation8 [shape = 'u8[65536]{0}', space=vmem, size = 0x10000, scoped, tag = 'input window, operand 2, single buffered']
    #allocation9 [shape = 'u8[65536]{0}', space=vmem, size = 0x10000, scoped, tag = 'input window, operand 3, single buffered']
    #allocation10 [shape = 's32[1]{0}', space=sflag, size = 0x4, scoped, tag = 'scoped memory for tpu_custom_call.1']
    #allocation11 [shape = 'u8[32768]{0}', space=vmem, size = 0x8000, scoped, tag = 'output window, operand 0, single buffered']
    %10 = vsyncpa [#allocation4], 0
    %11 = vsyncpa [#allocation7], 0
    %12 = vsyncpa [#allocation10], 0
    %13 = vsyncpa [#allocation5], 0
    // Predicated region
    $region2: #{tpu_custom_call.1} parent=1 // pred_check
      _
    $region3: #{tpu_custom_call.1} parent=1 // pred_check_branch
      %15 = sbr.rel (0) target = $region5
    $region4: #{tpu_custom_call.1} parent=1 // pred_region
      %s17 = ssub.s32 1024, 1024
      %18 = vsyncadd [#allocation4], %s17
      %s19 = sshll.u32 [#allocation3], 4
      %s20 = int_to_ptr.vmem [resolvable:$true] %s19
      %25 = dma.hbm_to_vmem [thread:$0]  %s0, 1024, %s20, [#allocation4], 128, 128, 8
    $region5: #{tpu_custom_call.1} parent=1 // pred_fallthru
      _
    // Predicated region
    $region6: #{tpu_custom_call.1} parent=1 // pred_check
      _
    $region7: #{tpu_custom_call.1} parent=1 // pred_check_branch
      %27 = sbr.rel (0) target = $region9
    $region8: #{tpu_custom_call.1} parent=1 // pred_region
      %s29 = ssub.s32 16384, 16384
      %30 = vsyncadd [#allocation7], %s29
      %s31 = sshll.u32 [#allocation6], 4
      %s32 = int_to_ptr.vmem [resolvable:$true] %s31
      %37 = dma.hbm_to_vmem [thread:$0]  %s1, 16384, %s32, [#allocation7], 1024, 1024, 64
    $region9: #{tpu_custom_call.1} parent=1 // pred_fallthru
      _
    // Predicated region
    $region10: #{tpu_custom_call.1} parent=1 // pred_check
      _
    $region11: #{tpu_custom_call.1} parent=1 // pred_check_branch
      %39 = sbr.rel (0) target = $region13
    $region12: #{tpu_custom_call.1} parent=1 // pred_region
      %s41 = ssub.s32 2048, 2048
      %42 = vsyncadd [#allocation7], %s41
      %s43 = sshll.u32 [#allocation8], 4
      %s44 = int_to_ptr.vmem [resolvable:$true] %s43
      %49 = dma.hbm_to_vmem [thread:$0]  %s2, 2048, %s44, [#allocation7], 256, 256, 16
    $region13: #{tpu_custom_call.1} parent=1 // pred_fallthru
      _
    // Predicated region
    $region14: #{tpu_custom_call.1} parent=1 // pred_check
      _
    $region15: #{tpu_custom_call.1} parent=1 // pred_check_branch
      %51 = sbr.rel (0) target = $region17
    $region16: #{tpu_custom_call.1} parent=1 // pred_region
      %s53 = ssub.s32 2048, 2048
      %54 = vsyncadd [#allocation10], %s53
      %s55 = sshll.u32 [#allocation9], 4
      %s56 = int_to_ptr.vmem [resolvable:$true] %s55
      %61 = dma.hbm_to_vmem [thread:$0]  %s3, 2048, %s56, [#allocation10], 128, 128, 8
    $region17: #{tpu_custom_call.1} parent=1 // pred_fallthru
      _
    // Predicated region
    $region18: #{tpu_custom_call.1} parent=1 // pred_check
      _
    $region19: #{tpu_custom_call.1} parent=1 // pred_check_branch
      %63 = sbr.rel (0) target = $region21
    $region20: #{tpu_custom_call.1} parent=1 // pred_region
      _
    $region21: #{tpu_custom_call.1} parent=1 // pred_fallthru
      _
    // Predicated region
    $region22: #{tpu_custom_call.1} parent=1 // pred_check
      _
    $region23: #{tpu_custom_call.1} parent=1 // pred_check_branch
      %65 = sbr.rel (0) target = $region25
    $region24: #{tpu_custom_call.1} parent=1 // pred_region
      %66 = dma.done [#allocation4], 1024
    $region25: #{tpu_custom_call.1} parent=1 // pred_fallthru
      _
    // Predicated region
    $region26: #{tpu_custom_call.1} parent=1 // pred_check
      _
    $region27: #{tpu_custom_call.1} parent=1 // pred_check_branch
      %68 = sbr.rel (0) target = $region29
    $region28: #{tpu_custom_call.1} parent=1 // pred_region
      %69 = dma.done [#allocation7], 16384
    $region29: #{tpu_custom_call.1} parent=1 // pred_fallthru
      _
    // Predicated region
    $region30: #{tpu_custom_call.1} parent=1 // pred_check
      _
    $region31: #{tpu_custom_call.1} parent=1 // pred_check_branch
      %71 = sbr.rel (0) target = $region33
    $region32: #{tpu_custom_call.1} parent=1 // pred_region
      %72 = dma.done [#allocation7], 2048
    $region33: #{tpu_custom_call.1} parent=1 // pred_fallthru
      _
    // Predicated region
    $region34: #{tpu_custom_call.1} parent=1 // pred_check
      _
    $region35: #{tpu_custom_call.1} parent=1 // pred_check_branch
      %74 = sbr.rel (0) target = $region37
    $region36: #{tpu_custom_call.1} parent=1 // pred_region
      %75 = dma.done [#allocation10], 2048
    $region37: #{tpu_custom_call.1} parent=1 // pred_fallthru
      _
    %v76 = vld [vmem:[#allocation3] sm:$0xff]
    %v77 = vld [vmem:[#allocation3 + $0x8] sm:$0xff]
    %v78 = vld [vmem:[#allocation3 + $0x10] sm:$0xff]
    %v79 = vld [vmem:[#allocation3 + $0x18] sm:$0xff]
    %v80 = vld [vmem:[#allocation3 + $0x20] sm:$0xff]
    %v81 = vld [vmem:[#allocation3 + $0x28] sm:$0xff]
    %v82 = vld [vmem:[#allocation3 + $0x30] sm:$0xff]
    %v83 = vld [vmem:[#allocation3 + $0x38] sm:$0xff]
    %v84 = vld [vmem:[#allocation6] sm:$0xff]
    %v85 = vld [vmem:[#allocation6 + $0x8] sm:$0xff]
    %v86 = vld [vmem:[#allocation6 + $0x10] sm:$0xff]
    %v87 = vld [vmem:[#allocation6 + $0x18] sm:$0xff]
    %v88 = vld [vmem:[#allocation6 + $0x20] sm:$0xff]
    %v89 = vld [vmem:[#allocation6 + $0x28] sm:$0xff]
    %v90 = vld [vmem:[#allocation6 + $0x30] sm:$0xff]
    %v91 = vld [vmem:[#allocation6 + $0x38] sm:$0xff]
    %v92 = vld [vmem:[#allocation6 + $0x40] sm:$0xff]
    %v93 = vld [vmem:[#allocation6 + $0x48] sm:$0xff]
    %v94 = vld [vmem:[#allocation6 + $0x50] sm:$0xff]
    %v95 = vld [vmem:[#allocation6 + $0x58] sm:$0xff]
    %v96 = vld [vmem:[#allocation6 + $0x60] sm:$0xff]
    %v97 = vld [vmem:[#allocation6 + $0x68] sm:$0xff]
    %v98 = vld [vmem:[#allocation6 + $0x70] sm:$0xff]
    %v99 = vld [vmem:[#allocation6 + $0x78] sm:$0xff]
    %v100 = vld [vmem:[#allocation6 + $0x80] sm:$0xff]
    %v101 = vld [vmem:[#allocation6 + $0x88] sm:$0xff]
    %v102 = vld [vmem:[#allocation6 + $0x90] sm:$0xff]
    %v103 = vld [vmem:[#allocation6 + $0x98] sm:$0xff]
    %v104 = vld [vmem:[#allocation6 + $0xa0] sm:$0xff]
    %v105 = vld [vmem:[#allocation6 + $0xa8] sm:$0xff]
    %v106 = vld [vmem:[#allocation6 + $0xb0] sm:$0xff]
    %v107 = vld [vmem:[#allocation6 + $0xb8] sm:$0xff]
    %v108 = vld [vmem:[#allocation6 + $0xc0] sm:$0xff]
    %v109 = vld [vmem:[#allocation6 + $0xc8] sm:$0xff]
    %v110 = vld [vmem:[#allocation6 + $0xd0] sm:$0xff]
    %v111 = vld [vmem:[#allocation6 + $0xd8] sm:$0xff]
    %v112 = vld [vmem:[#allocation6 + $0xe0] sm:$0xff]
    %v113 = vld [vmem:[#allocation6 + $0xe8] sm:$0xff]
    %v114 = vld [vmem:[#allocation6 + $0xf0] sm:$0xff]
    %v115 = vld [vmem:[#allocation6 + $0xf8] sm:$0xff]
    %v116 = vld [vmem:[#allocation6 + $0x100] sm:$0xff]
    %v117 = vld [vmem:[#allocation6 + $0x108] sm:$0xff]
    %v118 = vld [vmem:[#allocation6 + $0x110] sm:$0xff]
    %v119 = vld [vmem:[#allocation6 + $0x118] sm:$0xff]
    %v120 = vld [vmem:[#allocation6 + $0x120] sm:$0xff]
    %v121 = vld [vmem:[#allocation6 + $0x128] sm:$0xff]
    %v122 = vld [vmem:[#allocation6 + $0x130] sm:$0xff]
    %v123 = vld [vmem:[#allocation6 + $0x138] sm:$0xff]
    %v124 = vld [vmem:[#allocation6 + $0x140] sm:$0xff]
    %v125 = vld [vmem:[#allocation6 + $0x148] sm:$0xff]
    %v126 = vld [vmem:[#allocation6 + $0x150] sm:$0xff]
    %v127 = vld [vmem:[#allocation6 + $0x158] sm:$0xff]
    %v128 = vld [vmem:[#allocation6 + $0x160] sm:$0xff]
    %v129 = vld [vmem:[#allocation6 + $0x168] sm:$0xff]
    %v130 = vld [vmem:[#allocation6 + $0x170] sm:$0xff]
    %v131 = vld [vmem:[#allocation6 + $0x178] sm:$0xff]
    %v132 = vld [vmem:[#allocation6 + $0x180] sm:$0xff]
    %v133 = vld [vmem:[#allocation6 + $0x188] sm:$0xff]
    %v134 = vld [vmem:[#allocation6 + $0x190] sm:$0xff]
    %v135 = vld [vmem:[#allocation6 + $0x198] sm:$0xff]
    %v136 = vld [vmem:[#allocation6 + $0x1a0] sm:$0xff]
    %v137 = vld [vmem:[#allocation6 + $0x1a8] sm:$0xff]
    %v138 = vld [vmem:[#allocation6 + $0x1b0] sm:$0xff]
    %v139 = vld [vmem:[#allocation6 + $0x1b8] sm:$0xff]
    %v140 = vld [vmem:[#allocation6 + $0x1c0] sm:$0xff]
    %v141 = vld [vmem:[#allocation6 + $0x1c8] sm:$0xff]
    %v142 = vld [vmem:[#allocation6 + $0x1d0] sm:$0xff]
    %v143 = vld [vmem:[#allocation6 + $0x1d8] sm:$0xff]
    %v144 = vld [vmem:[#allocation6 + $0x1e0] sm:$0xff]
    %v145 = vld [vmem:[#allocation6 + $0x1e8] sm:$0xff]
    %v146 = vld [vmem:[#allocation6 + $0x1f0] sm:$0xff]
    %v147 = vld [vmem:[#allocation6 + $0x1f8] sm:$0xff]
    %v148 = vld [vmem:[#allocation6 + $0x200] sm:$0xff]
    %v149 = vld [vmem:[#allocation6 + $0x208] sm:$0xff]
    %v150 = vld [vmem:[#allocation6 + $0x210] sm:$0xff]
    %v151 = vld [vmem:[#allocation6 + $0x218] sm:$0xff]
    %v152 = vld [vmem:[#allocation6 + $0x220] sm:$0xff]
    %v153 = vld [vmem:[#allocation6 + $0x228] sm:$0xff]
    %v154 = vld [vmem:[#allocation6 + $0x230] sm:$0xff]
    %v155 = vld [vmem:[#allocation6 + $0x238] sm:$0xff]
    %v156 = vld [vmem:[#allocation6 + $0x240] sm:$0xff]
    %v157 = vld [vmem:[#allocation6 + $0x248] sm:$0xff]
    %v158 = vld [vmem:[#allocation6 + $0x250] sm:$0xff]
    %v159 = vld [vmem:[#allocation6 + $0x258] sm:$0xff]
    %v160 = vld [vmem:[#allocation6 + $0x260] sm:$0xff]
    %v161 = vld [vmem:[#allocation6 + $0x268] sm:$0xff]
    %v162 = vld [vmem:[#allocation6 + $0x270] sm:$0xff]
    %v163 = vld [vmem:[#allocation6 + $0x278] sm:$0xff]
    %v164 = vld [vmem:[#allocation6 + $0x280] sm:$0xff]
    %v165 = vld [vmem:[#allocation6 + $0x288] sm:$0xff]
    %v166 = vld [vmem:[#allocation6 + $0x290] sm:$0xff]
    %v167 = vld [vmem:[#allocation6 + $0x298] sm:$0xff]
    %v168 = vld [vmem:[#allocation6 + $0x2a0] sm:$0xff]
    %v169 = vld [vmem:[#allocation6 + $0x2a8] sm:$0xff]
    %v170 = vld [vmem:[#allocation6 + $0x2b0] sm:$0xff]
    %v171 = vld [vmem:[#allocation6 + $0x2b8] sm:$0xff]
    %v172 = vld [vmem:[#allocation6 + $0x2c0] sm:$0xff]
    %v173 = vld [vmem:[#allocation6 + $0x2c8] sm:$0xff]
    %v174 = vld [vmem:[#allocation6 + $0x2d0] sm:$0xff]
    %v175 = vld [vmem:[#allocation6 + $0x2d8] sm:$0xff]
    %v176 = vld [vmem:[#allocation6 + $0x2e0] sm:$0xff]
    %v177 = vld [vmem:[#allocation6 + $0x2e8] sm:$0xff]
    %v178 = vld [vmem:[#allocation6 + $0x2f0] sm:$0xff]
    %v179 = vld [vmem:[#allocation6 + $0x2f8] sm:$0xff]
    %v180 = vld [vmem:[#allocation6 + $0x300] sm:$0xff]
    %v181 = vld [vmem:[#allocation6 + $0x308] sm:$0xff]
    %v182 = vld [vmem:[#allocation6 + $0x310] sm:$0xff]
    %v183 = vld [vmem:[#allocation6 + $0x318] sm:$0xff]
    %v184 = vld [vmem:[#allocation6 + $0x320] sm:$0xff]
    %v185 = vld [vmem:[#allocation6 + $0x328] sm:$0xff]
    %v186 = vld [vmem:[#allocation6 + $0x330] sm:$0xff]
    %v187 = vld [vmem:[#allocation6 + $0x338] sm:$0xff]
    %v188 = vld [vmem:[#allocation6 + $0x340] sm:$0xff]
    %v189 = vld [vmem:[#allocation6 + $0x348] sm:$0xff]
    %v190 = vld [vmem:[#allocation6 + $0x350] sm:$0xff]
    %v191 = vld [vmem:[#allocation6 + $0x358] sm:$0xff]
    %v192 = vld [vmem:[#allocation6 + $0x360] sm:$0xff]
    %v193 = vld [vmem:[#allocation6 + $0x368] sm:$0xff]
    %v194 = vld [vmem:[#allocation6 + $0x370] sm:$0xff]
    %v195 = vld [vmem:[#allocation6 + $0x378] sm:$0xff]
    %v196 = vld [vmem:[#allocation6 + $0x380] sm:$0xff]
    %v197 = vld [vmem:[#allocation6 + $0x388] sm:$0xff]
    %v198 = vld [vmem:[#allocation6 + $0x390] sm:$0xff]
    %v199 = vld [vmem:[#allocation6 + $0x398] sm:$0xff]
    %v200 = vld [vmem:[#allocation6 + $0x3a0] sm:$0xff]
    %v201 = vld [vmem:[#allocation6 + $0x3a8] sm:$0xff]
    %v202 = vld [vmem:[#allocation6 + $0x3b0] sm:$0xff]
    %v203 = vld [vmem:[#allocation6 + $0x3b8] sm:$0xff]
    %v204 = vld [vmem:[#allocation6 + $0x3c0] sm:$0xff]
    %v205 = vld [vmem:[#allocation6 + $0x3c8] sm:$0xff]
    %v206 = vld [vmem:[#allocation6 + $0x3d0] sm:$0xff]
    %v207 = vld [vmem:[#allocation6 + $0x3d8] sm:$0xff]
    %v208 = vld [vmem:[#allocation6 + $0x3e0] sm:$0xff]
    %v209 = vld [vmem:[#allocation6 + $0x3e8] sm:$0xff]
    %v210 = vld [vmem:[#allocation6 + $0x3f0] sm:$0xff]
    %v211 = vld [vmem:[#allocation6 + $0x3f8] sm:$0xff]
    %212 = vmatprep.subr.mxu0 %v205
    %213 = vmatpush1.msra.mxu0 %v204
    %214 = vmatprep.subr.mxu0 %v197
    %215 = vmatpush1.msra.mxu0 %v196
    %216 = vmatprep.subr.mxu0 %v189
    %217 = vmatpush1.msra.mxu0 %v188
    %218 = vmatprep.subr.mxu0 %v181
    %219 = vmatpush1.msra.mxu0 %v180
    %220 = vmatprep.subr.mxu0 %v173
    %221 = vmatpush1.msra.mxu0 %v172
    %222 = vmatprep.subr.mxu0 %v165
    %223 = vmatpush1.msra.mxu0 %v164
    %224 = vmatprep.subr.mxu0 %v157
    %225 = vmatpush1.msra.mxu0 %v156
    %226 = vmatprep.subr.mxu0 %v149
    %227 = vmatpush1.msra.mxu0 %v148
    %228 = vmatprep.subr.mxu0 %v141
    %229 = vmatpush1.msra.mxu0 %v140
    %230 = vmatprep.subr.mxu0 %v133
    %231 = vmatpush1.msra.mxu0 %v132
    %232 = vmatprep.subr.mxu0 %v125
    %233 = vmatpush1.msra.mxu0 %v124
    %234 = vmatprep.subr.mxu0 %v117
    %235 = vmatpush1.msra.mxu0 %v116
    %236 = vmatprep.subr.mxu0 %v109
    %237 = vmatpush1.msra.mxu0 %v108
    %238 = vmatprep.subr.mxu0 %v101
    %239 = vmatpush1.msra.mxu0 %v100
    %240 = vmatprep.subr.mxu0 %v93
    %241 = vmatpush1.msra.mxu0 %v92
    %242 = vmatprep.subr.mxu0 %v85
    %243 = vmatpush1.msra.mxu0 %v84
    %244 = vmatprep.subr.mxu0 0.0
    %245 = vmatpush2.msra.mxu0 0.0
    %246 = vmatprep.subr.mxu0 0.0
    %247 = vmatpush2.msra.mxu0 0.0
    %248 = vmatprep.subr.mxu0 0.0
    %249 = vmatpush2.msra.mxu0 0.0
    %250 = vmatprep.subr.mxu0 0.0
    %251 = vmatpush2.msra.mxu0 0.0
    %252 = vmatprep.subr.mxu0 0.0
    %253 = vmatpush2.msra.mxu0 0.0
    %254 = vmatprep.subr.mxu0 0.0
    %255 = vmatpush2.msra.mxu0 0.0
    %256 = vmatprep.subr.mxu0 0.0
    %257 = vmatpush2.msra.mxu0 0.0
    %258 = vmatprep.subr.mxu0 0.0
    %259 = vmatpush2.msra.mxu0 0.0
    %260 = vmatprep.subr.mxu0 0.0
    %261 = vmatpush2.msra.mxu0 0.0
    %262 = vmatprep.subr.mxu0 0.0
    %263 = vmatpush2.msra.mxu0 0.0
    %264 = vmatprep.subr.mxu0 0.0
    %265 = vmatpush2.msra.mxu0 0.0
    %266 = vmatprep.subr.mxu0 0.0
    %267 = vmatpush2.msra.mxu0 0.0
    %268 = vmatprep.subr.mxu0 0.0
    %269 = vmatpush2.msra.mxu0 0.0
    %270 = vmatprep.subr.mxu0 0.0
    %271 = vmatpush2.msra.mxu0 0.0
    %272 = vmatprep.subr.mxu0 0.0
    %273 = vmatpush2.msra.mxu0 0.0
    %274 = vmatprep.subr.mxu0 0.0
    %275 = vmatpush2.msra.mxu0 0.0
    %276 = vmatprep.mubr.f32.mxu0 0.0
    %277 = vmatmul.mubr.f32.gmra.mxu0 %v76
    %v278 = vpop.f32.mrf.mxu0
    %v279 = vadd.f32 0.0, %v278
    %v280 = vpop.f32.mrf.mxu0
    %v281 = vadd.f32 0.0, %v280
    %282 = vmatprep.mubr.f32.mxu0 0.0
    %283 = vmatmul.mubr.f32.gmra.mxu0 %v77
    %v284 = vpop.f32.mrf.mxu0
    %v285 = vadd.f32 0.0, %v284
    %v286 = vpop.f32.mrf.mxu0
    %v287 = vadd.f32 0.0, %v286
    %288 = vmatprep.mubr.f32.mxu0 0.0
    %289 = vmatmul.mubr.f32.gmra.mxu0 %v78
    %v290 = vpop.f32.mrf.mxu0
    %v291 = vadd.f32 0.0, %v290
    %v292 = vpop.f32.mrf.mxu0
    %v293 = vadd.f32 0.0, %v292
    %294 = vmatprep.mubr.f32.mxu0 0.0
    %295 = vmatmul.mubr.f32.gmra.mxu0 %v79
    %v296 = vpop.f32.mrf.mxu0
    %v297 = vadd.f32 0.0, %v296
    %v298 = vpop.f32.mrf.mxu0
    %v299 = vadd.f32 0.0, %v298
    %300 = vmatprep.mubr.f32.mxu0 0.0
    %301 = vmatmul.mubr.f32.gmra.mxu0 %v80
    %v302 = vpop.f32.mrf.mxu0
    %v303 = vadd.f32 0.0, %v302
    %v304 = vpop.f32.mrf.mxu0
    %v305 = vadd.f32 0.0, %v304
    %306 = vmatprep.mubr.f32.mxu0 0.0
    %307 = vmatmul.mubr.f32.gmra.mxu0 %v81
    %v308 = vpop.f32.mrf.mxu0
    %v309 = vadd.f32 0.0, %v308
    %v310 = vpop.f32.mrf.mxu0
    %v311 = vadd.f32 0.0, %v310
    %312 = vmatprep.mubr.f32.mxu0 0.0
    %313 = vmatmul.mubr.f32.gmra.mxu0 %v82
    %v314 = vpop.f32.mrf.mxu0
    %v315 = vadd.f32 0.0, %v314
    %v316 = vpop.f32.mrf.mxu0
    %v317 = vadd.f32 0.0, %v316
    %318 = vmatprep.mubr.f32.mxu0 0.0
    %319 = vmatmul.mubr.f32.gmra.mxu0 %v83
    %v320 = vpop.f32.mrf.mxu0
    %v321 = vadd.f32 0.0, %v320
    %v322 = vpop.f32.mrf.mxu0
    %v323 = vadd.f32 0.0, %v322
    %324 = vdwg.mxu0
    %325 = vmatprep.subr.mxu0 %v207
    %326 = vmatpush1.msra.mxu0 %v206
    %327 = vmatprep.subr.mxu0 %v199
    %328 = vmatpush1.msra.mxu0 %v198
    %329 = vmatprep.subr.mxu0 %v191
    %330 = vmatpush1.msra.mxu0 %v190
    %331 = vmatprep.subr.mxu0 %v183
    %332 = vmatpush1.msra.mxu0 %v182
    %333 = vmatprep.subr.mxu0 %v175
    %334 = vmatpush1.msra.mxu0 %v174
    %335 = vmatprep.subr.mxu0 %v167
    %336 = vmatpush1.msra.mxu0 %v166
    %337 = vmatprep.subr.mxu0 %v159
    %338 = vmatpush1.msra.mxu0 %v158
    %339 = vmatprep.subr.mxu0 %v151
    %340 = vmatpush1.msra.mxu0 %v150
    %341 = vmatprep.subr.mxu0 %v143
    %342 = vmatpush1.msra.mxu0 %v142
    %343 = vmatprep.subr.mxu0 %v135
    %344 = vmatpush1.msra.mxu0 %v134
    %345 = vmatprep.subr.mxu0 %v127
    %346 = vmatpush1.msra.mxu0 %v126
    %347 = vmatprep.subr.mxu0 %v119
    %348 = vmatpush1.msra.mxu0 %v118
    %349 = vmatprep.subr.mxu0 %v111
    %350 = vmatpush1.msra.mxu0 %v110
    %351 = vmatprep.subr.mxu0 %v103
    %352 = vmatpush1.msra.mxu0 %v102
    %353 = vmatprep.subr.mxu0 %v95
    %354 = vmatpush1.msra.mxu0 %v94
    %355 = vmatprep.subr.mxu0 %v87
    %356 = vmatpush1.msra.mxu0 %v86
    %357 = vmatprep.subr.mxu0 0.0
    %358 = vmatpush2.msra.mxu0 0.0
    %359 = vmatprep.subr.mxu0 0.0
    %360 = vmatpush2.msra.mxu0 0.0
    %361 = vmatprep.subr.mxu0 0.0
    %362 = vmatpush2.msra.mxu0 0.0
    %363 = vmatprep.subr.mxu0 0.0
    %364 = vmatpush2.msra.mxu0 0.0
    %365 = vmatprep.subr.mxu0 0.0
    %366 = vmatpush2.msra.mxu0 0.0
    %367 = vmatprep.subr.mxu0 0.0
    %368 = vmatpush2.msra.mxu0 0.0
    %369 = vmatprep.subr.mxu0 0.0
    %370 = vmatpush2.msra.mxu0 0.0
    %371 = vmatprep.subr.mxu0 0.0
    %372 = vmatpush2.msra.mxu0 0.0
    %373 = vmatprep.subr.mxu0 0.0
    %374 = vmatpush2.msra.mxu0 0.0
    %375 = vmatprep.subr.mxu0 0.0
    %376 = vmatpush2.msra.mxu0 0.0
    %377 = vmatprep.subr.mxu0 0.0
    %378 = vmatpush2.msra.mxu0 0.0
    %379 = vmatprep.subr.mxu0 0.0
    %380 = vmatpush2.msra.mxu0 0.0
    %381 = vmatprep.subr.mxu0 0.0
    %382 = vmatpush2.msra.mxu0 0.0
    %383 = vmatprep.subr.mxu0 0.0
    %384 = vmatpush2.msra.mxu0 0.0
    %385 = vmatprep.subr.mxu0 0.0
    %386 = vmatpush2.msra.mxu0 0.0
    %387 = vmatprep.subr.mxu0 0.0
    %388 = vmatpush2.msra.mxu0 0.0
    %389 = vmatprep.mubr.f32.mxu0 0.0
    %390 = vmatmul.mubr.f32.gmra.mxu0 %v76
    %v391 = vpop.f32.mrf.mxu0
    %v392 = vadd.f32 0.0, %v391
    %v393 = vpop.f32.mrf.mxu0
    %v394 = vadd.f32 0.0, %v393
    %395 = vmatprep.mubr.f32.mxu0 0.0
    %396 = vmatmul.mubr.f32.gmra.mxu0 %v77
    %v397 = vpop.f32.mrf.mxu0
    %v398 = vadd.f32 0.0, %v397
    %v399 = vpop.f32.mrf.mxu0
    %v400 = vadd.f32 0.0, %v399
    %401 = vmatprep.mubr.f32.mxu0 0.0
    %402 = vmatmul.mubr.f32.gmra.mxu0 %v78
    %v403 = vpop.f32.mrf.mxu0
    %v404 = vadd.f32 0.0, %v403
    %v405 = vpop.f32.mrf.mxu0
    %v406 = vadd.f32 0.0, %v405
    %407 = vmatprep.mubr.f32.mxu0 0.0
    %408 = vmatmul.mubr.f32.gmra.mxu0 %v79
    %v409 = vpop.f32.mrf.mxu0
    %v410 = vadd.f32 0.0, %v409
    %v411 = vpop.f32.mrf.mxu0
    %v412 = vadd.f32 0.0, %v411
    %413 = vmatprep.mubr.f32.mxu0 0.0
    %414 = vmatmul.mubr.f32.gmra.mxu0 %v80
    %v415 = vpop.f32.mrf.mxu0
    %v416 = vadd.f32 0.0, %v415
    %v417 = vpop.f32.mrf.mxu0
    %v418 = vadd.f32 0.0, %v417
    %419 = vmatprep.mubr.f32.mxu0 0.0
    %420 = vmatmul.mubr.f32.gmra.mxu0 %v81
    %v421 = vpop.f32.mrf.mxu0
    %v422 = vadd.f32 0.0, %v421
    %v423 = vpop.f32.mrf.mxu0
    %v424 = vadd.f32 0.0, %v423
    %425 = vmatprep.mubr.f32.mxu0 0.0
    %426 = vmatmul.mubr.f32.gmra.mxu0 %v82
    %v427 = vpop.f32.mrf.mxu0
    %v428 = vadd.f32 0.0, %v427
    %v429 = vpop.f32.mrf.mxu0
    %v430 = vadd.f32 0.0, %v429
    %431 = vmatprep.mubr.f32.mxu0 0.0
    %432 = vmatmul.mubr.f32.gmra.mxu0 %v83
    %v433 = vpop.f32.mrf.mxu0
    %v434 = vadd.f32 0.0, %v433
    %v435 = vpop.f32.mrf.mxu0
    %v436 = vadd.f32 0.0, %v435
    %437 = vdwg.mxu0
    %438 = vmatprep.subr.mxu0 %v209
    %439 = vmatpush1.msra.mxu0 %v208
    %440 = vmatprep.subr.mxu0 %v201
    %441 = vmatpush1.msra.mxu0 %v200
    %442 = vmatprep.subr.mxu0 %v193
    %443 = vmatpush1.msra.mxu0 %v192
    %444 = vmatprep.subr.mxu0 %v185
    %445 = vmatpush1.msra.mxu0 %v184
    %446 = vmatprep.subr.mxu0 %v177
    %447 = vmatpush1.msra.mxu0 %v176
    %448 = vmatprep.subr.mxu0 %v169
    %449 = vmatpush1.msra.mxu0 %v168
    %450 = vmatprep.subr.mxu0 %v161
    %451 = vmatpush1.msra.mxu0 %v160
    %452 = vmatprep.subr.mxu0 %v153
    %453 = vmatpush1.msra.mxu0 %v152
    %454 = vmatprep.subr.mxu0 %v145
    %455 = vmatpush1.msra.mxu0 %v144
    %456 = vmatprep.subr.mxu0 %v137
    %457 = vmatpush1.msra.mxu0 %v136
    %458 = vmatprep.subr.mxu0 %v129
    %459 = vmatpush1.msra.mxu0 %v128
    %460 = vmatprep.subr.mxu0 %v121
    %461 = vmatpush1.msra.mxu0 %v120
    %462 = vmatprep.subr.mxu0 %v113
    %463 = vmatpush1.msra.mxu0 %v112
    %464 = vmatprep.subr.mxu0 %v105
    %465 = vmatpush1.msra.mxu0 %v104
    %466 = vmatprep.subr.mxu0 %v97
    %467 = vmatpush1.msra.mxu0 %v96
    %468 = vmatprep.subr.mxu0 %v89
    %469 = vmatpush1.msra.mxu0 %v88
    %470 = vmatprep.subr.mxu0 0.0
    %471 = vmatpush2.msra.mxu0 0.0
    %472 = vmatprep.subr.mxu0 0.0
    %473 = vmatpush2.msra.mxu0 0.0
    %474 = vmatprep.subr.mxu0 0.0
    %475 = vmatpush2.msra.mxu0 0.0
    %476 = vmatprep.subr.mxu0 0.0
    %477 = vmatpush2.msra.mxu0 0.0
    %478 = vmatprep.subr.mxu0 0.0
    %479 = vmatpush2.msra.mxu0 0.0
    %480 = vmatprep.subr.mxu0 0.0
    %481 = vmatpush2.msra.mxu0 0.0
    %482 = vmatprep.subr.mxu0 0.0
    %483 = vmatpush2.msra.mxu0 0.0
    %484 = vmatprep.subr.mxu0 0.0
    %485 = vmatpush2.msra.mxu0 0.0
    %486 = vmatprep.subr.mxu0 0.0
    %487 = vmatpush2.msra.mxu0 0.0
    %488 = vmatprep.subr.mxu0 0.0
    %489 = vmatpush2.msra.mxu0 0.0
    %490 = vmatprep.subr.mxu0 0.0
    %491 = vmatpush2.msra.mxu0 0.0
    %492 = vmatprep.subr.mxu0 0.0
    %493 = vmatpush2.msra.mxu0 0.0
    %494 = vmatprep.subr.mxu0 0.0
    %495 = vmatpush2.msra.mxu0 0.0
    %496 = vmatprep.subr.mxu0 0.0
    %497 = vmatpush2.msra.mxu0 0.0
    %498 = vmatprep.subr.mxu0 0.0
    %499 = vmatpush2.msra.mxu0 0.0
    %500 = vmatprep.subr.mxu0 0.0
    %501 = vmatpush2.msra.mxu0 0.0
    %502 = vmatprep.mubr.f32.mxu0 0.0
    %503 = vmatmul.mubr.f32.gmra.mxu0 %v76
    %v504 = vpop.f32.mrf.mxu0
    %v505 = vadd.f32 0.0, %v504
    %v506 = vpop.f32.mrf.mxu0
    %v507 = vadd.f32 0.0, %v506
    %508 = vmatprep.mubr.f32.mxu0 0.0
    %509 = vmatmul.mubr.f32.gmra.mxu0 %v77
    %v510 = vpop.f32.mrf.mxu0
    %v511 = vadd.f32 0.0, %v510
    %v512 = vpop.f32.mrf.mxu0
    %v513 = vadd.f32 0.0, %v512
    %514 = vmatprep.mubr.f32.mxu0 0.0
    %515 = vmatmul.mubr.f32.gmra.mxu0 %v78
    %v516 = vpop.f32.mrf.mxu0
    %v517 = vadd.f32 0.0, %v516
    %v518 = vpop.f32.mrf.mxu0
    %v519 = vadd.f32 0.0, %v518
    %520 = vmatprep.mubr.f32.mxu0 0.0
    %521 = vmatmul.mubr.f32.gmra.mxu0 %v79
    %v522 = vpop.f32.mrf.mxu0
    %v523 = vadd.f32 0.0, %v522
    %v524 = vpop.f32.mrf.mxu0
    %v525 = vadd.f32 0.0, %v524
    %526 = vmatprep.mubr.f32.mxu0 0.0
    %527 = vmatmul.mubr.f32.gmra.mxu0 %v80
    %v528 = vpop.f32.mrf.mxu0
    %v529 = vadd.f32 0.0, %v528
    %v530 = vpop.f32.mrf.mxu0
    %v531 = vadd.f32 0.0, %v530
    %532 = vmatprep.mubr.f32.mxu0 0.0
    %533 = vmatmul.mubr.f32.gmra.mxu0 %v81
    %v534 = vpop.f32.mrf.mxu0
    %v535 = vadd.f32 0.0, %v534
    %v536 = vpop.f32.mrf.mxu0
    %v537 = vadd.f32 0.0, %v536
    %538 = vmatprep.mubr.f32.mxu0 0.0
    %539 = vmatmul.mubr.f32.gmra.mxu0 %v82
    %v540 = vpop.f32.mrf.mxu0
    %v541 = vadd.f32 0.0, %v540
    %v542 = vpop.f32.mrf.mxu0
    %v543 = vadd.f32 0.0, %v542
    %544 = vmatprep.mubr.f32.mxu0 0.0
    %545 = vmatmul.mubr.f32.gmra.mxu0 %v83
    %v546 = vpop.f32.mrf.mxu0
    %v547 = vadd.f32 0.0, %v546
    %v548 = vpop.f32.mrf.mxu0
    %v549 = vadd.f32 0.0, %v548
    %550 = vdwg.mxu0
    %551 = vmatprep.subr.mxu0 %v211
    %552 = vmatpush1.msra.mxu0 %v210
    %553 = vmatprep.subr.mxu0 %v203
    %554 = vmatpush1.msra.mxu0 %v202
    %555 = vmatprep.subr.mxu0 %v195
    %556 = vmatpush1.msra.mxu0 %v194
    %557 = vmatprep.subr.mxu0 %v187
    %558 = vmatpush1.msra.mxu0 %v186
    %559 = vmatprep.subr.mxu0 %v179
    %560 = vmatpush1.msra.mxu0 %v178
    %561 = vmatprep.subr.mxu0 %v171
    %562 = vmatpush1.msra.mxu0 %v170
    %563 = vmatprep.subr.mxu0 %v163
    %564 = vmatpush1.msra.mxu0 %v162
    %565 = vmatprep.subr.mxu0 %v155
    %566 = vmatpush1.msra.mxu0 %v154
    %567 = vmatprep.subr.mxu0 %v147
    %568 = vmatpush1.msra.mxu0 %v146
    %569 = vmatprep.subr.mxu0 %v139
    %570 = vmatpush1.msra.mxu0 %v138
    %571 = vmatprep.subr.mxu0 %v131
    %572 = vmatpush1.msra.mxu0 %v130
    %573 = vmatprep.subr.mxu0 %v123
    %574 = vmatpush1.msra.mxu0 %v122
    %575 = vmatprep.subr.mxu0 %v115
    %576 = vmatpush1.msra.mxu0 %v114
    %577 = vmatprep.subr.mxu0 %v107
    %578 = vmatpush1.msra.mxu0 %v106
    %579 = vmatprep.subr.mxu0 %v99
    %580 = vmatpush1.msra.mxu0 %v98
    %581 = vmatprep.subr.mxu0 %v91
    %582 = vmatpush1.msra.mxu0 %v90
    %583 = vmatprep.subr.mxu0 0.0
    %584 = vmatpush2.msra.mxu0 0.0
    %585 = vmatprep.subr.mxu0 0.0
    %586 = vmatpush2.msra.mxu0 0.0
    %587 = vmatprep.subr.mxu0 0.0
    %588 = vmatpush2.msra.mxu0 0.0
    %589 = vmatprep.subr.mxu0 0.0
    %590 = vmatpush2.msra.mxu0 0.0
    %591 = vmatprep.subr.mxu0 0.0
    %592 = vmatpush2.msra.mxu0 0.0
    %593 = vmatprep.subr.mxu0 0.0
    %594 = vmatpush2.msra.mxu0 0.0
    %595 = vmatprep.subr.mxu0 0.0
    %596 = vmatpush2.msra.mxu0 0.0
    %597 = vmatprep.subr.mxu0 0.0
    %598 = vmatpush2.msra.mxu0 0.0
    %599 = vmatprep.subr.mxu0 0.0
    %600 = vmatpush2.msra.mxu0 0.0
    %601 = vmatprep.subr.mxu0 0.0
    %602 = vmatpush2.msra.mxu0 0.0
    %603 = vmatprep.subr.mxu0 0.0
    %604 = vmatpush2.msra.mxu0 0.0
    %605 = vmatprep.subr.mxu0 0.0
    %606 = vmatpush2.msra.mxu0 0.0
    %607 = vmatprep.subr.mxu0 0.0
    %608 = vmatpush2.msra.mxu0 0.0
    %609 = vmatprep.subr.mxu0 0.0
    %610 = vmatpush2.msra.mxu0 0.0
    %611 = vmatprep.subr.mxu0 0.0
    %612 = vmatpush2.msra.mxu0 0.0
    %613 = vmatprep.subr.mxu0 0.0
    %614 = vmatpush2.msra.mxu0 0.0
    %615 = vmatprep.mubr.f32.mxu0 0.0
    %616 = vmatmul.mubr.f32.gmra.mxu0 %v76
    %v617 = vpop.f32.mrf.mxu0
    %v618 = vadd.f32 0.0, %v617
    %v619 = vpop.f32.mrf.mxu0
    %v620 = vadd.f32 0.0, %v619
    %621 = vmatprep.mubr.f32.mxu0 0.0
    %622 = vmatmul.mubr.f32.gmra.mxu0 %v77
    %v623 = vpop.f32.mrf.mxu0
    %v624 = vadd.f32 0.0, %v623
    %v625 = vpop.f32.mrf.mxu0
    %v626 = vadd.f32 0.0, %v625
    %627 = vmatprep.mubr.f32.mxu0 0.0
    %628 = vmatmul.mubr.f32.gmra.mxu0 %v78
    %v629 = vpop.f32.mrf.mxu0
    %v630 = vadd.f32 0.0, %v629
    %v631 = vpop.f32.mrf.mxu0
    %v632 = vadd.f32 0.0, %v631
    %633 = vmatprep.mubr.f32.mxu0 0.0
    %634 = vmatmul.mubr.f32.gmra.mxu0 %v79
    %v635 = vpop.f32.mrf.mxu0
    %v636 = vadd.f32 0.0, %v635
    %v637 = vpop.f32.mrf.mxu0
    %v638 = vadd.f32 0.0, %v637
    %639 = vmatprep.mubr.f32.mxu0 0.0
    %640 = vmatmul.mubr.f32.gmra.mxu0 %v80
    %v641 = vpop.f32.mrf.mxu0
    %v642 = vadd.f32 0.0, %v641
    %v643 = vpop.f32.mrf.mxu0
    %v644 = vadd.f32 0.0, %v643
    %645 = vmatprep.mubr.f32.mxu0 0.0
    %646 = vmatmul.mubr.f32.gmra.mxu0 %v81
    %v647 = vpop.f32.mrf.mxu0
    %v648 = vadd.f32 0.0, %v647
    %v649 = vpop.f32.mrf.mxu0
    %v650 = vadd.f32 0.0, %v649
    %651 = vmatprep.mubr.f32.mxu0 0.0
    %652 = vmatmul.mubr.f32.gmra.mxu0 %v82
    %v653 = vpop.f32.mrf.mxu0
    %v654 = vadd.f32 0.0, %v653
    %v655 = vpop.f32.mrf.mxu0
    %v656 = vadd.f32 0.0, %v655
    %657 = vmatprep.mubr.f32.mxu0 0.0
    %658 = vmatmul.mubr.f32.gmra.mxu0 %v83
    %v659 = vpop.f32.mrf.mxu0
    %v660 = vadd.f32 0.0, %v659
    %v661 = vpop.f32.mrf.mxu0
    %v662 = vadd.f32 0.0, %v661
    %663 = vdwg.mxu0
    %664 = vst [vmem:[#allocation2] sm:$0xff] %v279
    %665 = vst [vmem:[#allocation2 + $0x8] sm:$0xff] %v285
    %666 = vst [vmem:[#allocation2 + $0x10] sm:$0xff] %v291
    %667 = vst [vmem:[#allocation2 + $0x18] sm:$0xff] %v297
    %668 = vst [vmem:[#allocation2 + $0x20] sm:$0xff] %v303
    %669 = vst [vmem:[#allocation2 + $0x28] sm:$0xff] %v309
    %670 = vst [vmem:[#allocation2 + $0x30] sm:$0xff] %v315
    %671 = vst [vmem:[#allocation2 + $0x38] sm:$0xff] %v321
    %672 = vst [vmem:[#allocation2 + $0x40] sm:$0xff] %v281
    %673 = vst [vmem:[#allocation2 + $0x48] sm:$0xff] %v287
    %674 = vst [vmem:[#allocation2 + $0x50] sm:$0xff] %v293
    %675 = vst [vmem:[#allocation2 + $0x58] sm:$0xff] %v299
    %676 = vst [vmem:[#allocation2 + $0x60] sm:$0xff] %v305
    %677 = vst [vmem:[#allocation2 + $0x68] sm:$0xff] %v311
    %678 = vst [vmem:[#allocation2 + $0x70] sm:$0xff] %v317
    %679 = vst [vmem:[#allocation2 + $0x78] sm:$0xff] %v323
    %680 = vst [vmem:[#allocation2 + $0x80] sm:$0xff] %v392
    %681 = vst [vmem:[#allocation2 + $0x88] sm:$0xff] %v398
    %682 = vst [vmem:[#allocation2 + $0x90] sm:$0xff] %v404
    %683 = vst [vmem:[#allocation2 + $0x98] sm:$0xff] %v410
    %684 = vst [vmem:[#allocation2 + $0xa0] sm:$0xff] %v416
    %685 = vst [vmem:[#allocation2 + $0xa8] sm:$0xff] %v422
    %686 = vst [vmem:[#allocation2 + $0xb0] sm:$0xff] %v428
    %687 = vst [vmem:[#allocation2 + $0xb8] sm:$0xff] %v434
    %688 = vst [vmem:[#allocation2 + $0xc0] sm:$0xff] %v394
    %689 = vst [vmem:[#allocation2 + $0xc8] sm:$0xff] %v400
    %690 = vst [vmem:[#allocation2 + $0xd0] sm:$0xff] %v406
    %691 = vst [vmem:[#allocation2 + $0xd8] sm:$0xff] %v412
    %692 = vst [vmem:[#allocation2 + $0xe0] sm:$0xff] %v418
    %693 = vst [vmem:[#allocation2 + $0xe8] sm:$0xff] %v424
    %694 = vst [vmem:[#allocation2 + $0xf0] sm:$0xff] %v430
    %695 = vst [vmem:[#allocation2 + $0xf8] sm:$0xff] %v436
    %696 = vst [vmem:[#allocation2 + $0x100] sm:$0xff] %v505
    %697 = vst [vmem:[#allocation2 + $0x108] sm:$0xff] %v511
    %698 = vst [vmem:[#allocation2 + $0x110] sm:$0xff] %v517
    %699 = vst [vmem:[#allocation2 + $0x118] sm:$0xff] %v523
    %700 = vst [vmem:[#allocation2 + $0x120] sm:$0xff] %v529
    %701 = vst [vmem:[#allocation2 + $0x128] sm:$0xff] %v535
    %702 = vst [vmem:[#allocation2 + $0x130] sm:$0xff] %v541
    %703 = vst [vmem:[#allocation2 + $0x138] sm:$0xff] %v547
    %704 = vst [vmem:[#allocation2 + $0x140] sm:$0xff] %v507
    %705 = vst [vmem:[#allocation2 + $0x148] sm:$0xff] %v513
    %706 = vst [vmem:[#allocation2 + $0x150] sm:$0xff] %v519
    %707 = vst [vmem:[#allocation2 + $0x158] sm:$0xff] %v525
    %708 = vst [vmem:[#allocation2 + $0x160] sm:$0xff] %v531
    %709 = vst [vmem:[#allocation2 + $0x168] sm:$0xff] %v537
    %710 = vst [vmem:[#allocation2 + $0x170] sm:$0xff] %v543
    %711 = vst [vmem:[#allocation2 + $0x178] sm:$0xff] %v549
    %712 = vst [vmem:[#allocation2 + $0x180] sm:$0xff] %v618
    %713 = vst [vmem:[#allocation2 + $0x188] sm:$0xff] %v624
    %714 = vst [vmem:[#allocation2 + $0x190] sm:$0xff] %v630
    %715 = vst [vmem:[#allocation2 + $0x198] sm:$0xff] %v636
    %716 = vst [vmem:[#allocation2 + $0x1a0] sm:$0xff] %v642
    %717 = vst [vmem:[#allocation2 + $0x1a8] sm:$0xff] %v648
    %718 = vst [vmem:[#allocation2 + $0x1b0] sm:$0xff] %v654
    %719 = vst [vmem:[#allocation2 + $0x1b8] sm:$0xff] %v660
    %720 = vst [vmem:[#allocation2 + $0x1c0] sm:$0xff] %v620
    %721 = vst [vmem:[#allocation2 + $0x1c8] sm:$0xff] %v626
    %722 = vst [vmem:[#allocation2 + $0x1d0] sm:$0xff] %v632
    %723 = vst [vmem:[#allocation2 + $0x1d8] sm:$0xff] %v638
    %724 = vst [vmem:[#allocation2 + $0x1e0] sm:$0xff] %v644
    %725 = vst [vmem:[#allocation2 + $0x1e8] sm:$0xff] %v650
    %726 = vst [vmem:[#allocation2 + $0x1f0] sm:$0xff] %v656
    %727 = vst [vmem:[#allocation2 + $0x1f8] sm:$0xff] %v662
    %v728 = vld [vmem:[#allocation8] sm:$0xff]
    %v729 = vld [vmem:[#allocation8 + $0x8] sm:$0xff]
    %v730 = vld [vmem:[#allocation8 + $0x10] sm:$0xff]
    %v731 = vld [vmem:[#allocation8 + $0x18] sm:$0xff]
    %v732 = vld [vmem:[#allocation8 + $0x20] sm:$0xff]
    %v733 = vld [vmem:[#allocation8 + $0x28] sm:$0xff]
    %v734 = vld [vmem:[#allocation8 + $0x30] sm:$0xff]
    %v735 = vld [vmem:[#allocation8 + $0x38] sm:$0xff]
    %v736 = vld [vmem:[#allocation8 + $0x40] sm:$0xff]
    %v737 = vld [vmem:[#allocation8 + $0x48] sm:$0xff]
    %v738 = vld [vmem:[#allocation8 + $0x50] sm:$0xff]
    %v739 = vld [vmem:[#allocation8 + $0x58] sm:$0xff]
    %v740 = vld [vmem:[#allocation8 + $0x60] sm:$0xff]
    %v741 = vld [vmem:[#allocation8 + $0x68] sm:$0xff]
    %v742 = vld [vmem:[#allocation8 + $0x70] sm:$0xff]
    %v743 = vld [vmem:[#allocation8 + $0x78] sm:$0xff]
    %v744 = vunpack.c.l.bf16 %v728
    %v745 = vunpack.c.h.bf16 %v728
    %v746 = vunpack.c.l.bf16 %v729
    %v747 = vunpack.c.h.bf16 %v729
    %v748 = vunpack.c.l.bf16 %v730
    %v749 = vunpack.c.h.bf16 %v730
    %v750 = vunpack.c.l.bf16 %v731
    %v751 = vunpack.c.h.bf16 %v731
    %v752 = vunpack.c.l.bf16 %v732
    %v753 = vunpack.c.h.bf16 %v732
    %v754 = vunpack.c.l.bf16 %v733
    %v755 = vunpack.c.h.bf16 %v733
    %v756 = vunpack.c.l.bf16 %v734
    %v757 = vunpack.c.h.bf16 %v734
    %v758 = vunpack.c.l.bf16 %v735
    %v759 = vunpack.c.h.bf16 %v735
    %v760 = vunpack.c.l.bf16 %v736
    %v761 = vunpack.c.h.bf16 %v736
    %v762 = vunpack.c.l.bf16 %v737
    %v763 = vunpack.c.h.bf16 %v737
    %v764 = vunpack.c.l.bf16 %v738
    %v765 = vunpack.c.h.bf16 %v738
    %v766 = vunpack.c.l.bf16 %v739
    %v767 = vunpack.c.h.bf16 %v739
    %v768 = vunpack.c.l.bf16 %v740
    %v769 = vunpack.c.h.bf16 %v740
    %v770 = vunpack.c.l.bf16 %v741
    %v771 = vunpack.c.h.bf16 %v741
    %v772 = vunpack.c.l.bf16 %v742
    %v773 = vunpack.c.h.bf16 %v742
    %v774 = vunpack.c.l.bf16 %v743
    %v775 = vunpack.c.h.bf16 %v743
    %v776 = vld [vmem:[#allocation2] sm:$0xff]
    %v777 = vld [vmem:[#allocation2 + $0x8] sm:$0xff]
    %v778 = vld [vmem:[#allocation2 + $0x10] sm:$0xff]
    %v779 = vld [vmem:[#allocation2 + $0x18] sm:$0xff]
    %v780 = vld [vmem:[#allocation2 + $0x20] sm:$0xff]
    %v781 = vld [vmem:[#allocation2 + $0x28] sm:$0xff]
    %v782 = vld [vmem:[#allocation2 + $0x30] sm:$0xff]
    %v783 = vld [vmem:[#allocation2 + $0x38] sm:$0xff]
    %v784 = vld [vmem:[#allocation2 + $0x40] sm:$0xff]
    %v785 = vld [vmem:[#allocation2 + $0x48] sm:$0xff]
    %v786 = vld [vmem:[#allocation2 + $0x50] sm:$0xff]
    %v787 = vld [vmem:[#allocation2 + $0x58] sm:$0xff]
    %v788 = vld [vmem:[#allocation2 + $0x60] sm:$0xff]
    %v789 = vld [vmem:[#allocation2 + $0x68] sm:$0xff]
    %v790 = vld [vmem:[#allocation2 + $0x70] sm:$0xff]
    %v791 = vld [vmem:[#allocation2 + $0x78] sm:$0xff]
    %v792 = vld [vmem:[#allocation2 + $0x80] sm:$0xff]
    %v793 = vld [vmem:[#allocation2 + $0x88] sm:$0xff]
    %v794 = vld [vmem:[#allocation2 + $0x90] sm:$0xff]
    %v795 = vld [vmem:[#allocation2 + $0x98] sm:$0xff]
    %v796 = vld [vmem:[#allocation2 + $0xa0] sm:$0xff]
    %v797 = vld [vmem:[#allocation2 + $0xa8] sm:$0xff]
    %v798 = vld [vmem:[#allocation2 + $0xb0] sm:$0xff]
    %v799 = vld [vmem:[#allocation2 + $0xb8] sm:$0xff]
    %v800 = vld [vmem:[#allocation2 + $0xc0] sm:$0xff]
    %v801 = vld [vmem:[#allocation2 + $0xc8] sm:$0xff]
    %v802 = vld [vmem:[#allocation2 + $0xd0] sm:$0xff]
    %v803 = vld [vmem:[#allocation2 + $0xd8] sm:$0xff]
    %v804 = vld [vmem:[#allocation2 + $0xe0] sm:$0xff]
    %v805 = vld [vmem:[#allocation2 + $0xe8] sm:$0xff]
    %v806 = vld [vmem:[#allocation2 + $0xf0] sm:$0xff]
    %v807 = vld [vmem:[#allocation2 + $0xf8] sm:$0xff]
    %v808 = vld [vmem:[#allocation2 + $0x100] sm:$0xff]
    %v809 = vld [vmem:[#allocation2 + $0x108] sm:$0xff]
    %v810 = vld [vmem:[#allocation2 + $0x110] sm:$0xff]
    %v811 = vld [vmem:[#allocation2 + $0x118] sm:$0xff]
    %v812 = vld [vmem:[#allocation2 + $0x120] sm:$0xff]
    %v813 = vld [vmem:[#allocation2 + $0x128] sm:$0xff]
    %v814 = vld [vmem:[#allocation2 + $0x130] sm:$0xff]
    %v815 = vld [vmem:[#allocation2 + $0x138] sm:$0xff]
    %v816 = vld [vmem:[#allocation2 + $0x140] sm:$0xff]
    %v817 = vld [vmem:[#allocation2 + $0x148] sm:$0xff]
    %v818 = vld [vmem:[#allocation2 + $0x150] sm:$0xff]
    %v819 = vld [vmem:[#allocation2 + $0x158] sm:$0xff]
    %v820 = vld [vmem:[#allocation2 + $0x160] sm:$0xff]
    %v821 = vld [vmem:[#allocation2 + $0x168] sm:$0xff]
    %v822 = vld [vmem:[#allocation2 + $0x170] sm:$0xff]
    %v823 = vld [vmem:[#allocation2 + $0x178] sm:$0xff]
    %v824 = vld [vmem:[#allocation2 + $0x180] sm:$0xff]
    %v825 = vld [vmem:[#allocation2 + $0x188] sm:$0xff]
    %v826 = vld [vmem:[#allocation2 + $0x190] sm:$0xff]
    %v827 = vld [vmem:[#allocation2 + $0x198] sm:$0xff]
    %v828 = vld [vmem:[#allocation2 + $0x1a0] sm:$0xff]
    %v829 = vld [vmem:[#allocation2 + $0x1a8] sm:$0xff]
    %v830 = vld [vmem:[#allocation2 + $0x1b0] sm:$0xff]
    %v831 = vld [vmem:[#allocation2 + $0x1b8] sm:$0xff]
    %v832 = vld [vmem:[#allocation2 + $0x1c0] sm:$0xff]
    %v833 = vld [vmem:[#allocation2 + $0x1c8] sm:$0xff]
    %v834 = vld [vmem:[#allocation2 + $0x1d0] sm:$0xff]
    %v835 = vld [vmem:[#allocation2 + $0x1d8] sm:$0xff]
    %v836 = vld [vmem:[#allocation2 + $0x1e0] sm:$0xff]
    %v837 = vld [vmem:[#allocation2 + $0x1e8] sm:$0xff]
    %v838 = vld [vmem:[#allocation2 + $0x1f0] sm:$0xff]
    %v839 = vld [vmem:[#allocation2 + $0x1f8] sm:$0xff]
    %v840 = vld [vmem:[#allocation9] sm:$0xff]
    %v841 = vld [vmem:[#allocation9 + $0x8] sm:$0xff]
    %v842 = vld [vmem:[#allocation9 + $0x10] sm:$0xff]
    %v843 = vld [vmem:[#allocation9 + $0x18] sm:$0xff]
    %v844 = vld [vmem:[#allocation9 + $0x20] sm:$0xff]
    %v845 = vld [vmem:[#allocation9 + $0x28] sm:$0xff]
    %v846 = vld [vmem:[#allocation9 + $0x30] sm:$0xff]
    %v847 = vld [vmem:[#allocation9 + $0x38] sm:$0xff]
    %v848 = vld [vmem:[#allocation9 + $0x40] sm:$0xff]
    %v849 = vld [vmem:[#allocation9 + $0x48] sm:$0xff]
    %v850 = vld [vmem:[#allocation9 + $0x50] sm:$0xff]
    %v851 = vld [vmem:[#allocation9 + $0x58] sm:$0xff]
    %v852 = vld [vmem:[#allocation9 + $0x60] sm:$0xff]
    %v853 = vld [vmem:[#allocation9 + $0x68] sm:$0xff]
    %v854 = vld [vmem:[#allocation9 + $0x70] sm:$0xff]
    %v855 = vld [vmem:[#allocation9 + $0x78] sm:$0xff]
    %856 = vmatprep.subr.mxu0 0.0
    %857 = vmatpush1.msra.mxu0 %v855
    %858 = vmatprep.subr.mxu0 0.0
    %859 = vmatpush1.msra.mxu0 %v854
    %860 = vmatprep.subr.mxu0 0.0
    %861 = vmatpush1.msra.mxu0 %v853
    %862 = vmatprep.subr.mxu0 0.0
    %863 = vmatpush1.msra.mxu0 %v852
    %864 = vmatprep.subr.mxu0 0.0
    %865 = vmatpush1.msra.mxu0 %v851
    %866 = vmatprep.subr.mxu0 0.0
    %867 = vmatpush1.msra.mxu0 %v850
    %868 = vmatprep.subr.mxu0 0.0
    %869 = vmatpush1.msra.mxu0 %v849
    %870 = vmatprep.subr.mxu0 0.0
    %871 = vmatpush1.msra.mxu0 %v848
    %872 = vmatprep.subr.mxu0 0.0
    %873 = vmatpush1.msra.mxu0 %v847
    %874 = vmatprep.subr.mxu0 0.0
    %875 = vmatpush1.msra.mxu0 %v846
    %876 = vmatprep.subr.mxu0 0.0
    %877 = vmatpush1.msra.mxu0 %v845
    %878 = vmatprep.subr.mxu0 0.0
    %879 = vmatpush1.msra.mxu0 %v844
    %880 = vmatprep.subr.mxu0 0.0
    %881 = vmatpush1.msra.mxu0 %v843
    %882 = vmatprep.subr.mxu0 0.0
    %883 = vmatpush1.msra.mxu0 %v842
    %884 = vmatprep.subr.mxu0 0.0
    %885 = vmatpush1.msra.mxu0 %v841
    %886 = vmatprep.subr.mxu0 0.0
    %887 = vmatpush1.msra.mxu0 %v840
    %888 = vmatprep.subr.mxu0 0.0
    %889 = vmatpush2.msra.mxu0 0.0
    %890 = vmatprep.subr.mxu0 0.0
    %891 = vmatpush2.msra.mxu0 0.0
    %892 = vmatprep.subr.mxu0 0.0
    %893 = vmatpush2.msra.mxu0 0.0
    %894 = vmatprep.subr.mxu0 0.0
    %895 = vmatpush2.msra.mxu0 0.0
    %896 = vmatprep.subr.mxu0 0.0
    %897 = vmatpush2.msra.mxu0 0.0
    %898 = vmatprep.subr.mxu0 0.0
    %899 = vmatpush2.msra.mxu0 0.0
    %900 = vmatprep.subr.mxu0 0.0
    %901 = vmatpush2.msra.mxu0 0.0
    %902 = vmatprep.subr.mxu0 0.0
    %903 = vmatpush2.msra.mxu0 0.0
    %904 = vmatprep.subr.mxu0 0.0
    %905 = vmatpush2.msra.mxu0 0.0
    %906 = vmatprep.subr.mxu0 0.0
    %907 = vmatpush2.msra.mxu0 0.0
    %908 = vmatprep.subr.mxu0 0.0
    %909 = vmatpush2.msra.mxu0 0.0
    %910 = vmatprep.subr.mxu0 0.0
    %911 = vmatpush2.msra.mxu0 0.0
    %912 = vmatprep.subr.mxu0 0.0
    %913 = vmatpush2.msra.mxu0 0.0
    %914 = vmatprep.subr.mxu0 0.0
    %915 = vmatpush2.msra.mxu0 0.0
    %916 = vmatprep.subr.mxu0 0.0
    %917 = vmatpush2.msra.mxu0 0.0
    %918 = vmatprep.subr.mxu0 0.0
    %919 = vmatpush2.msra.mxu0 0.0
    %920 = vmatprep.mubr.f32.mxu0 0.0
    %921 = vmatmul.mubr.f32.gmra.mxu0 %v76
    %v922 = vpop.f32.mrf.mxu0
    %v923 = vadd.f32 0.0, %v922
    %v924 = vpop.f32.mrf.mxu0
    %925 = vmatprep.mubr.f32.mxu0 0.0
    %926 = vmatmul.mubr.f32.gmra.mxu0 %v77
    %v927 = vpop.f32.mrf.mxu0
    %v928 = vadd.f32 0.0, %v927
    %v929 = vpop.f32.mrf.mxu0
    %930 = vmatprep.mubr.f32.mxu0 0.0
    %931 = vmatmul.mubr.f32.gmra.mxu0 %v78
    %v932 = vpop.f32.mrf.mxu0
    %v933 = vadd.f32 0.0, %v932
    %v934 = vpop.f32.mrf.mxu0
    %935 = vmatprep.mubr.f32.mxu0 0.0
    %936 = vmatmul.mubr.f32.gmra.mxu0 %v79
    %v937 = vpop.f32.mrf.mxu0
    %v938 = vadd.f32 0.0, %v937
    %v939 = vpop.f32.mrf.mxu0
    %940 = vmatprep.mubr.f32.mxu0 0.0
    %941 = vmatmul.mubr.f32.gmra.mxu0 %v80
    %v942 = vpop.f32.mrf.mxu0
    %v943 = vadd.f32 0.0, %v942
    %v944 = vpop.f32.mrf.mxu0
    %945 = vmatprep.mubr.f32.mxu0 0.0
    %946 = vmatmul.mubr.f32.gmra.mxu0 %v81
    %v947 = vpop.f32.mrf.mxu0
    %v948 = vadd.f32 0.0, %v947
    %v949 = vpop.f32.mrf.mxu0
    %950 = vmatprep.mubr.f32.mxu0 0.0
    %951 = vmatmul.mubr.f32.gmra.mxu0 %v82
    %v952 = vpop.f32.mrf.mxu0
    %v953 = vadd.f32 0.0, %v952
    %v954 = vpop.f32.mrf.mxu0
    %955 = vmatprep.mubr.f32.mxu0 0.0
    %956 = vmatmul.mubr.f32.gmra.mxu0 %v83
    %v957 = vpop.f32.mrf.mxu0
    %v958 = vadd.f32 0.0, %v957
    %v959 = vpop.f32.mrf.mxu0
    %960 = vdwg.mxu0
    %961 = vmatprep.subr.mxu0 0.0
    %962 = vmatpush1.msra.mxu0 %v791
    %963 = vmatprep.subr.mxu0 0.0
    %964 = vmatpush1.msra.mxu0 %v790
    %965 = vmatprep.subr.mxu0 0.0
    %966 = vmatpush1.msra.mxu0 %v789
    %967 = vmatprep.subr.mxu0 0.0
    %968 = vmatpush1.msra.mxu0 %v788
    %969 = vmatprep.subr.mxu0 0.0
    %970 = vmatpush1.msra.mxu0 %v787
    %971 = vmatprep.subr.mxu0 0.0
    %972 = vmatpush1.msra.mxu0 %v786
    %973 = vmatprep.subr.mxu0 0.0
    %974 = vmatpush1.msra.mxu0 %v785
    %975 = vmatprep.subr.mxu0 0.0
    %976 = vmatpush1.msra.mxu0 %v784
    %977 = vmatprep.subr.mxu0 0.0
    %978 = vmatpush1.msra.mxu0 %v783
    %979 = vmatprep.subr.mxu0 0.0
    %980 = vmatpush1.msra.mxu0 %v782
    %981 = vmatprep.subr.mxu0 0.0
    %982 = vmatpush1.msra.mxu0 %v781
    %983 = vmatprep.subr.mxu0 0.0
    %984 = vmatpush1.msra.mxu0 %v780
    %985 = vmatprep.subr.mxu0 0.0
    %986 = vmatpush1.msra.mxu0 %v779
    %987 = vmatprep.subr.mxu0 0.0
    %988 = vmatpush1.msra.mxu0 %v778
    %989 = vmatprep.subr.mxu0 0.0
    %990 = vmatpush1.msra.mxu0 %v777
    %991 = vmatprep.subr.mxu0 0.0
    %992 = vmatpush1.msra.mxu0 %v776
    %993 = vmatprep.subr.mxu0 0.0
    %994 = vmatpush2.msra.mxu0 %v807
    %995 = vmatprep.subr.mxu0 0.0
    %996 = vmatpush2.msra.mxu0 %v806
    %997 = vmatprep.subr.mxu0 0.0
    %998 = vmatpush2.msra.mxu0 %v805
    %999 = vmatprep.subr.mxu0 0.0
    %1000 = vmatpush2.msra.mxu0 %v804
    %1001 = vmatprep.subr.mxu0 0.0
    %1002 = vmatpush2.msra.mxu0 %v803
    %1003 = vmatprep.subr.mxu0 0.0
    %1004 = vmatpush2.msra.mxu0 %v802
    %1005 = vmatprep.subr.mxu0 0.0
    %1006 = vmatpush2.msra.mxu0 %v801
    %1007 = vmatprep.subr.mxu0 0.0
    %1008 = vmatpush2.msra.mxu0 %v800
    %1009 = vmatprep.subr.mxu0 0.0
    %1010 = vmatpush2.msra.mxu0 %v799
    %1011 = vmatprep.subr.mxu0 0.0
    %1012 = vmatpush2.msra.mxu0 %v798
    %1013 = vmatprep.subr.mxu0 0.0
    %1014 = vmatpush2.msra.mxu0 %v797
    %1015 = vmatprep.subr.mxu0 0.0
    %1016 = vmatpush2.msra.mxu0 %v796
    %1017 = vmatprep.subr.mxu0 0.0
    %1018 = vmatpush2.msra.mxu0 %v795
    %1019 = vmatprep.subr.mxu0 0.0
    %1020 = vmatpush2.msra.mxu0 %v794
    %1021 = vmatprep.subr.mxu0 0.0
    %1022 = vmatpush2.msra.mxu0 %v793
    %1023 = vmatprep.subr.mxu0 0.0
    %1024 = vmatpush2.msra.mxu0 %v792
    %1025 = vmatprep.mubr.f32.mxu0 %v745
    %1026 = vmatmul.mubr.f32.gmra.mxu0 %v744
    %v1027 = vpop.f32.mrf.mxu0
    %v1028 = vadd.f32 %v923, %v1027
    %v1029 = vpop.f32.mrf.mxu0
    %1030 = vmatprep.mubr.f32.mxu0 %v749
    %1031 = vmatmul.mubr.f32.gmra.mxu0 %v748
    %v1032 = vpop.f32.mrf.mxu0
    %v1033 = vadd.f32 %v928, %v1032
    %v1034 = vpop.f32.mrf.mxu0
    %1035 = vmatprep.mubr.f32.mxu0 %v753
    %1036 = vmatmul.mubr.f32.gmra.mxu0 %v752
    %v1037 = vpop.f32.mrf.mxu0
    %v1038 = vadd.f32 %v933, %v1037
    %v1039 = vpop.f32.mrf.mxu0
    %1040 = vmatprep.mubr.f32.mxu0 %v757
    %1041 = vmatmul.mubr.f32.gmra.mxu0 %v756
    %v1042 = vpop.f32.mrf.mxu0
    %v1043 = vadd.f32 %v938, %v1042
    %v1044 = vpop.f32.mrf.mxu0
    %1045 = vmatprep.mubr.f32.mxu0 %v761
    %1046 = vmatmul.mubr.f32.gmra.mxu0 %v760
    %v1047 = vpop.f32.mrf.mxu0
    %v1048 = vadd.f32 %v943, %v1047
    %v1049 = vpop.f32.mrf.mxu0
    %1050 = vmatprep.mubr.f32.mxu0 %v765
    %1051 = vmatmul.mubr.f32.gmra.mxu0 %v764
    %v1052 = vpop.f32.mrf.mxu0
    %v1053 = vadd.f32 %v948, %v1052
    %v1054 = vpop.f32.mrf.mxu0
    %1055 = vmatprep.mubr.f32.mxu0 %v769
    %1056 = vmatmul.mubr.f32.gmra.mxu0 %v768
    %v1057 = vpop.f32.mrf.mxu0
    %v1058 = vadd.f32 %v953, %v1057
    %v1059 = vpop.f32.mrf.mxu0
    %1060 = vmatprep.mubr.f32.mxu0 %v773
    %1061 = vmatmul.mubr.f32.gmra.mxu0 %v772
    %v1062 = vpop.f32.mrf.mxu0
    %v1063 = vadd.f32 %v958, %v1062
    %v1064 = vpop.f32.mrf.mxu0
    %1065 = vdwg.mxu0
    %1066 = vmatprep.subr.mxu0 0.0
    %1067 = vmatpush1.msra.mxu0 %v823
    %1068 = vmatprep.subr.mxu0 0.0
    %1069 = vmatpush1.msra.mxu0 %v822
    %1070 = vmatprep.subr.mxu0 0.0
    %1071 = vmatpush1.msra.mxu0 %v821
    %1072 = vmatprep.subr.mxu0 0.0
    %1073 = vmatpush1.msra.mxu0 %v820
    %1074 = vmatprep.subr.mxu0 0.0
    %1075 = vmatpush1.msra.mxu0 %v819
    %1076 = vmatprep.subr.mxu0 0.0
    %1077 = vmatpush1.msra.mxu0 %v818
    %1078 = vmatprep.subr.mxu0 0.0
    %1079 = vmatpush1.msra.mxu0 %v817
    %1080 = vmatprep.subr.mxu0 0.0
    %1081 = vmatpush1.msra.mxu0 %v816
    %1082 = vmatprep.subr.mxu0 0.0
    %1083 = vmatpush1.msra.mxu0 %v815
    %1084 = vmatprep.subr.mxu0 0.0
    %1085 = vmatpush1.msra.mxu0 %v814
    %1086 = vmatprep.subr.mxu0 0.0
    %1087 = vmatpush1.msra.mxu0 %v813
    %1088 = vmatprep.subr.mxu0 0.0
    %1089 = vmatpush1.msra.mxu0 %v812
    %1090 = vmatprep.subr.mxu0 0.0
    %1091 = vmatpush1.msra.mxu0 %v811
    %1092 = vmatprep.subr.mxu0 0.0
    %1093 = vmatpush1.msra.mxu0 %v810
    %1094 = vmatprep.subr.mxu0 0.0
    %1095 = vmatpush1.msra.mxu0 %v809
    %1096 = vmatprep.subr.mxu0 0.0
    %1097 = vmatpush1.msra.mxu0 %v808
    %1098 = vmatprep.subr.mxu0 0.0
    %1099 = vmatpush2.msra.mxu0 %v839
    %1100 = vmatprep.subr.mxu0 0.0
    %1101 = vmatpush2.msra.mxu0 %v838
    %1102 = vmatprep.subr.mxu0 0.0
    %1103 = vmatpush2.msra.mxu0 %v837
    %1104 = vmatprep.subr.mxu0 0.0
    %1105 = vmatpush2.msra.mxu0 %v836
    %1106 = vmatprep.subr.mxu0 0.0
    %1107 = vmatpush2.msra.mxu0 %v835
    %1108 = vmatprep.subr.mxu0 0.0
    %1109 = vmatpush2.msra.mxu0 %v834
    %1110 = vmatprep.subr.mxu0 0.0
    %1111 = vmatpush2.msra.mxu0 %v833
    %1112 = vmatprep.subr.mxu0 0.0
    %1113 = vmatpush2.msra.mxu0 %v832
    %1114 = vmatprep.subr.mxu0 0.0
    %1115 = vmatpush2.msra.mxu0 %v831
    %1116 = vmatprep.subr.mxu0 0.0
    %1117 = vmatpush2.msra.mxu0 %v830
    %1118 = vmatprep.subr.mxu0 0.0
    %1119 = vmatpush2.msra.mxu0 %v829
    %1120 = vmatprep.subr.mxu0 0.0
    %1121 = vmatpush2.msra.mxu0 %v828
    %1122 = vmatprep.subr.mxu0 0.0
    %1123 = vmatpush2.msra.mxu0 %v827
    %1124 = vmatprep.subr.mxu0 0.0
    %1125 = vmatpush2.msra.mxu0 %v826
    %1126 = vmatprep.subr.mxu0 0.0
    %1127 = vmatpush2.msra.mxu0 %v825
    %1128 = vmatprep.subr.mxu0 0.0
    %1129 = vmatpush2.msra.mxu0 %v824
    %1130 = vmatprep.mubr.f32.mxu0 %v747
    %1131 = vmatmul.mubr.f32.gmra.mxu0 %v746
    %v1132 = vpop.f32.mrf.mxu0
    %v1133 = vadd.f32 %v1028, %v1132
    %v1134 = vpop.f32.mrf.mxu0
    %1135 = vmatprep.mubr.f32.mxu0 %v751
    %1136 = vmatmul.mubr.f32.gmra.mxu0 %v750
    %v1137 = vpop.f32.mrf.mxu0
    %v1138 = vadd.f32 %v1033, %v1137
    %v1139 = vpop.f32.mrf.mxu0
    %1140 = vmatprep.mubr.f32.mxu0 %v755
    %1141 = vmatmul.mubr.f32.gmra.mxu0 %v754
    %v1142 = vpop.f32.mrf.mxu0
    %v1143 = vadd.f32 %v1038, %v1142
    %v1144 = vpop.f32.mrf.mxu0
    %1145 = vmatprep.mubr.f32.mxu0 %v759
    %1146 = vmatmul.mubr.f32.gmra.mxu0 %v758
    %v1147 = vpop.f32.mrf.mxu0
    %v1148 = vadd.f32 %v1043, %v1147
    %v1149 = vpop.f32.mrf.mxu0
    %1150 = vmatprep.mubr.f32.mxu0 %v763
    %1151 = vmatmul.mubr.f32.gmra.mxu0 %v762
    %v1152 = vpop.f32.mrf.mxu0
    %v1153 = vadd.f32 %v1048, %v1152
    %v1154 = vpop.f32.mrf.mxu0
    %1155 = vmatprep.mubr.f32.mxu0 %v767
    %1156 = vmatmul.mubr.f32.gmra.mxu0 %v766
    %v1157 = vpop.f32.mrf.mxu0
    %v1158 = vadd.f32 %v1053, %v1157
    %v1159 = vpop.f32.mrf.mxu0
    %1160 = vmatprep.mubr.f32.mxu0 %v771
    %1161 = vmatmul.mubr.f32.gmra.mxu0 %v770
    %v1162 = vpop.f32.mrf.mxu0
    %v1163 = vadd.f32 %v1058, %v1162
    %v1164 = vpop.f32.mrf.mxu0
    %1165 = vmatprep.mubr.f32.mxu0 %v775
    %1166 = vmatmul.mubr.f32.gmra.mxu0 %v774
    %v1167 = vpop.f32.mrf.mxu0
    %v1168 = vadd.f32 %v1063, %v1167
    %v1169 = vpop.f32.mrf.mxu0
    %1170 = vdwg.mxu0
    %v1171 = vld [vmem:[%s4] sm:$0x1]
    %v1173 = vlaneseq
    %v1174 = vshrl.u32 %v1173, 7
    %v1175 = vsub.s32 0, %v1174
    %v1176 = vrot.slane %v1171, %v1175
    %v1178 = vadd.f32 %v1133, %v1176
    %v1179 = vadd.f32 %v1138, %v1176
    %v1180 = vadd.f32 %v1143, %v1176
    %v1181 = vadd.f32 %v1148, %v1176
    %v1182 = vadd.f32 %v1153, %v1176
    %v1183 = vadd.f32 %v1158, %v1176
    %v1184 = vadd.f32 %v1163, %v1176
    %v1185 = vadd.f32 %v1168, %v1176
    %1186 = vst [vmem:[#allocation11] sm:$0xff] %v1178
    %1187 = vst [vmem:[#allocation11 + $0x8] sm:$0xff] %v1179
    %1188 = vst [vmem:[#allocation11 + $0x10] sm:$0xff] %v1180
    %1189 = vst [vmem:[#allocation11 + $0x18] sm:$0xff] %v1181
    %1190 = vst [vmem:[#allocation11 + $0x20] sm:$0xff] %v1182
    %1191 = vst [vmem:[#allocation11 + $0x28] sm:$0xff] %v1183
    %1192 = vst [vmem:[#allocation11 + $0x30] sm:$0xff] %v1184
    %1193 = vst [vmem:[#allocation11 + $0x38] sm:$0xff] %v1185
    // Predicated region
    $region38: #{tpu_custom_call.1} parent=1 // pred_check
      _
    $region39: #{tpu_custom_call.1} parent=1 // pred_check_branch
      %1195 = sbr.rel (0) target = $region41
    $region40: #{tpu_custom_call.1} parent=1 // pred_region
      %s1197 = ssub.s32 1024, 1024
      %1198 = vsyncadd [#allocation5], %s1197
      %s1199 = sshll.u32 [#allocation11], 4
      %s1200 = int_to_ptr.vmem [resolvable:$true] %s1199
      %1205 = dma.vmem_to_hbm [thread:$0]  %s1200, 1024, %s5, [#allocation5], 128, 128, 8
    $region41: #{tpu_custom_call.1} parent=1 // pred_fallthru
      _
    // Predicated region
    $region42: #{tpu_custom_call.1} parent=1 // pred_check
      _
    $region43: #{tpu_custom_call.1} parent=1 // pred_check_branch
      %1207 = sbr.rel (0) target = $region45
    $region44: #{tpu_custom_call.1} parent=1 // pred_region
      %1208 = dma.done [#allocation5], 1024
    $region45: #{tpu_custom_call.1} parent=1 // pred_fallthru
      _
    %1209 = vsyncpa [#allocation4], 1
    %1210 = vsyncpa [#allocation7], 1
    %1211 = vsyncpa [#allocation10], 1
    %1212 = vsyncpa [#allocation5], 1

</llo_original>
